<compile_context>
chip_gen: v7x
topology: tpu7x:2x2x1
jax: 0.10.0
libtpu: 0.0.40
codegen_flags: <defaults>
</compile_context>

<pallas_src>
import jax
import jax.numpy as jnp
from jax.experimental import pallas as pl
from jax.experimental.pallas import tpu as pltpu

MIDDLE_CHANNELS = 32
EPS = 0.1
NEG_SLOPE = 0.2
K_PAD = 8                 # input features zero-padded 5 -> 8 (sublane-aligned MXU K)
DEFAULT_B_TILE = 16384    # lanes per grid step; multiple of 128; fits v5e/v6e/v7x VMEM


def _round_up(x, m):
    return (x + m - 1) // m * m


def _leaky_relu(x):
    # max(x, slope*x) == LeakyReLU for 0 < slope < 1: mul+max (2 VALU ops)
    # instead of cmp+mul+select (3 ops).
    return jnp.maximum(x, NEG_SLOPE * x)


def diff_to_logits_kernel(d1_ref, d2_ref, w1_ref, b1_ref, w2_ref, b2_ref,
                          w3_ref, b3_ref, o_ref):
    hp = jax.lax.Precision.HIGHEST  # match reference; MXU has plenty of slack

    d1 = d1_ref[...].astype(jnp.float32)               # (1, BT)
    d2 = d2_ref[...].astype(jnp.float32)                # (1, BT)

    difference = d1 - d2
    # Ratios via EUP reciprocal (exact; approx=False keeps the 1e-5 tolerance).
    ratio1 = d1 * pl.reciprocal(d2 + EPS, approx=False)
    ratio2 = d2 * pl.reciprocal(d1 + EPS, approx=False)

    # (8, BT) lane-dense feature slab; rows 5..7 are zero (w1 columns 5..7 are
    # zero too), so the padded MXU contraction is exact.
    zeros = jnp.zeros((K_PAD - 5, d1.shape[1]), jnp.float32)
    feats = jnp.concatenate([d1, d2, difference, ratio1, ratio2, zeros], axis=0)

    # Layer 1 (1x1 conv, C_in=5 padded to 8) on the MXU.
    h = jnp.dot(w1_ref[...], feats, precision=hp,
                preferred_element_type=jnp.float32) + b1_ref[...]      # (M, BT)
    h = _leaky_relu(h)

    # Layer 2 (M x M) on the MXU.
    h = jnp.dot(w2_ref[...], h, precision=hp,
                preferred_element_type=jnp.float32) + b2_ref[...]      # (M, BT)
    h = _leaky_relu(h)

    # Layer 3 (C_out=1) as a (1, M) x (M, BT) MXU dot; b3 is an SMEM scalar.
    out = jnp.dot(w3_ref[...], h, precision=hp,
                  preferred_element_type=jnp.float32) + b3_ref[0, 0]   # (1, BT)

    o_ref[...] = out.astype(o_ref.dtype)


def diff_to_logits(diff1, diff2, params, b_tile=DEFAULT_B_TILE):
    """diff1, diff2: (B, 1, 1, 1) float32.  Returns (B, 1, 1, 1) float32."""
    B = diff1.shape[0]
    w1, b1, w2, b2, w3, b3 = params
    M = w1.shape[0]

    # Batch rides the lane axis; pass the two diffs as separate lane-dense rows
    # (no wrapper-side stack copy -> roughly halves this op's HBM traffic).
    d1 = diff1.reshape(1, B).astype(jnp.float32)
    d2 = diff2.reshape(1, B).astype(jnp.float32)

    # Zero-pad w1's input channels 5 -> 8 to match the (8, BT) feature slab,
    # and present w3 as a (1, M) row for the layer-3 MXU dot.
    w1p = jnp.pad(w1, ((0, 0), (0, K_PAD - w1.shape[1])))
    w3r = w3.reshape(1, M)

    bt = min(b_tile, _round_up(B, 128))
    # Give v7x's two TensorCores >=2 grid steps whenever the batch allows it.
    if _round_up(B, 128) >= 256:
        bt = min(bt, _round_up((B + 1) // 2, 128))
    B_pad = _round_up(B, bt)
    if B_pad != B:
        pad = ((0, 0), (0, B_pad - B))
        d1 = jnp.pad(d1, pad)   # zero pad is safe: 0/(0+eps)=0, pad logits sliced off
        d2 = jnp.pad(d2, pad)

    grid = (B_pad // bt,)
    cost = pl.CostEstimate(
        flops=2 * B_pad * (K_PAD * M + M * M + M),
        transcendentals=2 * B_pad,
        bytes_accessed=(2 + 1) * 4 * B_pad,
    )
    const = lambda i: (0, 0)  # weights/biases stay VMEM-resident across the grid

    out = pl.pallas_call(
        diff_to_logits_kernel,
        out_shape=jax.ShapeDtypeStruct((1, B_pad), jnp.float32),
        grid=grid,
        in_specs=[
            pl.BlockSpec((1, bt), lambda i: (0, i)),            # diff1 (lane-dense)
            pl.BlockSpec((1, bt), lambda i: (0, i)),            # diff2 (lane-dense)
            pl.BlockSpec((M, K_PAD), const),                    # w1 (C_out, 8), cols 5..7 = 0
            pl.BlockSpec((M, 1), const),                        # b1
            pl.BlockSpec((M, M), const),                        # w2
            pl.BlockSpec((M, 1), const),                        # b2
            pl.BlockSpec((1, M), const),                        # w3 as a row
            pl.BlockSpec(memory_space=pltpu.MemorySpace.SMEM),  # b3 scalar
        ],
        out_specs=pl.BlockSpec((1, bt), lambda i: (0, i)),      # lane-dense output
        compiler_params=pltpu.CompilerParams(
            dimension_semantics=("parallel",)),                 # v7x dual-TC sharding
        cost_estimate=cost,
    )(d1, d2, w1p, b1, w2, b2, w3r, b3)

    return out[0, :B].reshape(B, 1, 1, 1)


def init_params(key, middle_channels=MIDDLE_CHANNELS):
    """Deterministic synthetic init matching nn.Conv2d(.., kernel_size=1) shapes.

    PyTorch conv weights are (C_out, C_in, 1, 1); we store them squeezed as
    (C_out, C_in).  Biases are columns (C_out, 1); b3 is a (1, 1) scalar.
    """
    k1, k2, k3, k4, k5, k6 = jax.random.split(key, 6)
    M = middle_channels
    w1 = jax.random.normal(k1, (M, 5), jnp.float32) * 0.2
    b1 = jax.random.normal(k2, (M, 1), jnp.float32) * 0.05
    w2 = jax.random.normal(k3, (M, M), jnp.float32) * 0.1
    b2 = jax.random.normal(k4, (M, 1), jnp.float32) * 0.05
    w3 = jax.random.normal(k5, (M, 1), jnp.float32) * 0.1
    b3 = jax.random.normal(k6, (1, 1), jnp.float32) * 0.05
    return (w1, b1, w2, b2, w3, b3)


def _reference(diff1, diff2, params, eps=EPS):
    """Pure-JAX reference mirroring the PyTorch forward."""
    w1, b1, w2, b2, w3, b3 = params
    B = diff1.shape[0]
    d1 = diff1.reshape(B, 1)
    d2 = diff2.reshape(B, 1)
    feats = jnp.concatenate(
        [d1, d2, d1 - d2, d1 / (d2 + eps), d2 / (d1 + eps)], axis=1)  # (B, 5)
    hp = jax.lax.Precision.HIGHEST
    h = jnp.dot(feats, w1.T, precision=hp) + b1.T
    h = jnp.where(h > 0, h, NEG_SLOPE * h)
    h = jnp.dot(h, w2.T, precision=hp) + b2.T
    h = jnp.where(h > 0, h, NEG_SLOPE * h)
    out = jnp.dot(h, w3, precision=hp) + b3.T
    return out.reshape(B, 1, 1, 1)


if __name__ == "__main__":
    key = jax.random.PRNGKey(0)
    kp, ka, kb = jax.random.split(key, 3)

    B = 2
    params = init_params(kp)
    # LPIPS distances are non-negative; use abs of normals.
    diff1 = jnp.abs(jax.random.normal(ka, (B, 1, 1, 1), jnp.float32))
    diff2 = jnp.abs(jax.random.normal(kb, (B, 1, 1, 1), jnp.float32))

    out = diff_to_logits(diff1, diff2, params)
    out = jax.block_until_ready(out)

    ref = _reference(diff1, diff2, params)
    assert out.shape == (B, 1, 1, 1)
    assert jnp.allclose(out, ref, atol=1e-5, rtol=1e-5), (out, ref)

    print("KERNEL_OK")
</pallas_src>

<mosaic_0001>
module attributes {stable_mosaic.version = 11 : i64} {
  func.func @diff_to_logits_kernel(%arg0: i32, %arg1: memref<1x128xf32, #tpu.memory_space<vmem>>, %arg2: memref<1x128xf32, #tpu.memory_space<vmem>>, %arg3: memref<32x8xf32, #tpu.memory_space<vmem>>, %arg4: memref<32x1xf32, #tpu.memory_space<vmem>>, %arg5: memref<32x32xf32, #tpu.memory_space<vmem>>, %arg6: memref<32x1xf32, #tpu.memory_space<vmem>>, %arg7: memref<1x32xf32, #tpu.memory_space<vmem>>, %arg8: memref<1x1xf32, #tpu.memory_space<smem>>, %arg9: memref<1x128xf32, #tpu.memory_space<vmem>>) attributes {dimension_semantics = [#tpu.dimension_semantics<parallel>], iteration_bounds = array<i64: 1>, scalar_prefetch = 0 : i64, scratch_operands = 0 : i64, tpu.core_type = #tpu.core_type<tc>, window_params = [{transform_indices = @transform_0, window_bounds = array<i64: 1, 128>}, {transform_indices = @transform_1, window_bounds = array<i64: 1, 128>}, {pipeline_mode = #tpu.pipeline_mode<synchronous>, transform_indices = @transform_2, window_bounds = array<i64: 32, 8>}, {pipeline_mode = #tpu.pipeline_mode<synchronous>, transform_indices = @transform_3, window_bounds = array<i64: 32, 1>}, {pipeline_mode = #tpu.pipeline_mode<synchronous>, transform_indices = @transform_4, window_bounds = array<i64: 32, 32>}, {pipeline_mode = #tpu.pipeline_mode<synchronous>, transform_indices = @transform_5, window_bounds = array<i64: 32, 1>}, {pipeline_mode = #tpu.pipeline_mode<synchronous>, transform_indices = @transform_6, window_bounds = array<i64: 1, 32>}, {transform_indices = @transform_7, window_bounds = array<i64: 1, 1>}, {transform_indices = @transform_8, window_bounds = array<i64: 1, 128>}]} {
    %c0 = arith.constant 0 : index
    %c0_0 = arith.constant 0 : index
    %0 = vector.load %arg1[%c0, %c0_0] : memref<1x128xf32, #tpu.memory_space<vmem>>, vector<1x128xf32>
    %c0_1 = arith.constant 0 : index
    %c0_2 = arith.constant 0 : index
    %1 = vector.load %arg2[%c0_1, %c0_2] : memref<1x128xf32, #tpu.memory_space<vmem>>, vector<1x128xf32>
    %2 = arith.subf %0, %1 : vector<1x128xf32>
    %cst = arith.constant 1.000000e-01 : f32
    %3 = vector.broadcast %cst : f32 to vector<1x128xf32>
    %4 = arith.addf %1, %3 : vector<1x128xf32>
    %5 = tpu.reciprocal %4 : vector<1x128xf32> -> vector<1x128xf32>
    %6 = arith.mulf %0, %5 : vector<1x128xf32>
    %cst_3 = arith.constant 1.000000e-01 : f32
    %7 = vector.broadcast %cst_3 : f32 to vector<1x128xf32>
    %8 = arith.addf %0, %7 : vector<1x128xf32>
    %9 = tpu.reciprocal %8 : vector<1x128xf32> -> vector<1x128xf32>
    %10 = arith.mulf %1, %9 : vector<1x128xf32>
    %cst_4 = arith.constant 0.000000e+00 : f32
    %11 = vector.broadcast %cst_4 : f32 to vector<3x128xf32>
    %12 = tpu.concatenate %0, %1, %2, %6, %10, %11 in 0 : vector<1x128xf32>, vector<1x128xf32>, vector<1x128xf32>, vector<1x128xf32>, vector<1x128xf32>, vector<3x128xf32> -> vector<8x128xf32>
    %c0_5 = arith.constant 0 : index
    %c0_6 = arith.constant 0 : index
    %13 = vector.load %arg3[%c0_5, %c0_6] : memref<32x8xf32, #tpu.memory_space<vmem>>, vector<32x8xf32>
    %cst_7 = arith.constant dense<0.000000e+00> : vector<32x128xf32>
    %14 = tpu.matmul %13, %12, %cst_7 {dimension_numbers = #tpu.dot_dimension_numbers<[1], [0], [0], [1], [0, 0, 1, 1], [], []>, precision = #tpu.contract_precision<fp32>} : vector<32x8xf32>, vector<8x128xf32>, vector<32x128xf32> -> vector<32x128xf32>
    %c0_8 = arith.constant 0 : index
    %c0_9 = arith.constant 0 : index
    %15 = vector.load %arg4[%c0_8, %c0_9] : memref<32x1xf32, #tpu.memory_space<vmem>>, vector<32x1xf32>
    %16 = vector.broadcast %15 : vector<32x1xf32> to vector<32x128xf32>
    %17 = arith.addf %14, %16 : vector<32x128xf32>
    %cst_10 = arith.constant 2.000000e-01 : f32
    %18 = vector.broadcast %cst_10 : f32 to vector<32x128xf32>
    %19 = arith.mulf %18, %17 : vector<32x128xf32>
    %20 = arith.maximumf %17, %19 : vector<32x128xf32>
    %c0_11 = arith.constant 0 : index
    %c0_12 = arith.constant 0 : index
    %21 = vector.load %arg5[%c0_11, %c0_12] : memref<32x32xf32, #tpu.memory_space<vmem>>, vector<32x32xf32>
    %cst_13 = arith.constant dense<0.000000e+00> : vector<32x128xf32>
    %22 = tpu.matmul %21, %20, %cst_13 {dimension_numbers = #tpu.dot_dimension_numbers<[1], [0], [0], [1], [0, 0, 1, 1], [], []>, precision = #tpu.contract_precision<fp32>} : vector<32x32xf32>, vector<32x128xf32>, vector<32x128xf32> -> vector<32x128xf32>
    %c0_14 = arith.constant 0 : index
    %c0_15 = arith.constant 0 : index
    %23 = vector.load %arg6[%c0_14, %c0_15] : memref<32x1xf32, #tpu.memory_space<vmem>>, vector<32x1xf32>
    %24 = vector.broadcast %23 : vector<32x1xf32> to vector<32x128xf32>
    %25 = arith.addf %22, %24 : vector<32x128xf32>
    %cst_16 = arith.constant 2.000000e-01 : f32
    %26 = vector.broadcast %cst_16 : f32 to vector<32x128xf32>
    %27 = arith.mulf %26, %25 : vector<32x128xf32>
    %28 = arith.maximumf %25, %27 : vector<32x128xf32>
    %c0_17 = arith.constant 0 : index
    %c0_18 = arith.constant 0 : index
    %29 = vector.load %arg7[%c0_17, %c0_18] : memref<1x32xf32, #tpu.memory_space<vmem>>, vector<1x32xf32>
    %cst_19 = arith.constant dense<0.000000e+00> : vector<1x128xf32>
    %30 = tpu.matmul %29, %28, %cst_19 {dimension_numbers = #tpu.dot_dimension_numbers<[1], [0], [0], [1], [0, 0, 1, 1], [], []>, precision = #tpu.contract_precision<fp32>} : vector<1x32xf32>, vector<32x128xf32>, vector<1x128xf32> -> vector<1x128xf32>
    %c0_20 = arith.constant 0 : index
    %c0_21 = arith.constant 0 : index
    %31 = memref.load %arg8[%c0_20, %c0_21] : memref<1x1xf32, #tpu.memory_space<smem>>
    %32 = vector.broadcast %31 : f32 to vector<1x128xf32>
    %33 = arith.addf %30, %32 : vector<1x128xf32>
    %c0_22 = arith.constant 0 : index
    %c0_23 = arith.constant 0 : index
    %34 = vector.load %arg9[%c0_22, %c0_23] : memref<1x128xf32, #tpu.memory_space<vmem>>, vector<1x128xf32>
    tpu.vector_store %arg9[%c0_22, %c0_23], %33 {strides = array<i32>} : memref<1x128xf32, #tpu.memory_space<vmem>>, vector<1x128xf32>,
    return
  }
  func.func @transform_0(%arg0: i32) -> (i32, i32) {
    %c0_i32 = arith.constant 0 : i32
    %c0_i32_0 = arith.constant 0 : i32
    return %c0_i32, %arg0 : i32, i32
  }
  func.func @transform_1(%arg0: i32) -> (i32, i32) {
    %c0_i32 = arith.constant 0 : i32
    %c0_i32_0 = arith.constant 0 : i32
    return %c0_i32, %arg0 : i32, i32
  }
  func.func @transform_2(%arg0: i32) -> (i32, i32) {
    %c0_i32 = arith.constant 0 : i32
    %c0_i32_0 = arith.constant 0 : i32
    %c0_i32_1 = arith.constant 0 : i32
    return %c0_i32, %c0_i32_0 : i32, i32
  }
  func.func @transform_3(%arg0: i32) -> (i32, i32) {
    %c0_i32 = arith.constant 0 : i32
    %c0_i32_0 = arith.constant 0 : i32
    %c0_i32_1 = arith.constant 0 : i32
    return %c0_i32, %c0_i32_0 : i32, i32
  }
  func.func @transform_4(%arg0: i32) -> (i32, i32) {
    %c0_i32 = arith.constant 0 : i32
    %c0_i32_0 = arith.constant 0 : i32
    %c0_i32_1 = arith.constant 0 : i32
    return %c0_i32, %c0_i32_0 : i32, i32
  }
  func.func @transform_5(%arg0: i32) -> (i32, i32) {
    %c0_i32 = arith.constant 0 : i32
    %c0_i32_0 = arith.constant 0 : i32
    %c0_i32_1 = arith.constant 0 : i32
    return %c0_i32, %c0_i32_0 : i32, i32
  }
  func.func @transform_6(%arg0: i32) -> (i32, i32) {
    %c0_i32 = arith.constant 0 : i32
    %c0_i32_0 = arith.constant 0 : i32
    %c0_i32_1 = arith.constant 0 : i32
    return %c0_i32, %c0_i32_0 : i32, i32
  }
  func.func @transform_7(%arg0: i32) -> (i32, i32) {
    %c0_i32 = arith.constant 0 : i32
    %c0_i32_0 = arith.constant 0 : i32
    %c0_i32_1 = arith.constant 0 : i32
    return %c0_i32, %c0_i32_0 : i32, i32
  }
  func.func @transform_8(%arg0: i32) -> (i32, i32) {
    %c0_i32 = arith.constant 0 : i32
    %c0_i32_0 = arith.constant 0 : i32
    return %c0_i32, %arg0 : i32, i32
  }
}

</mosaic_0001>

<llo_original>
// kernel: tpu_custom_call.1
$region0: #{tpu_custom_call.1}
  #allocation0 [shape = 'u32[]', space=smem, size = 0x4, offset = 0x4, fixed_abs, tag = 'smem constant byte address 0x4 - core index']
  #allocation1 [shape = 'u32[144,128]{1,0:T(1,128)}', space=vmem, size = 0x12000, scoped, tag = 'internal scratch']
  #allocation2 [shape = 'f32[1,1]{1,0:T(1,128)S(6)}', space=smem, size = 0x200, scoped, tag = 'scoped memory for tpu_custom_call.1']
  %s0 = inlined_call_operand.vmem [shape: f32[1,128], index: 0, kind: input, shape index: {}]
  %s1 = inlined_call_operand.vmem [shape: f32[1,128], index: 1, kind: input, shape index: {}]
  %s2 = inlined_call_operand.vmem [shape: f32[32,8], index: 2, kind: input, shape index: {}]
  %s3 = inlined_call_operand.vmem [shape: f32[32,1], index: 3, kind: input, shape index: {}]
  %s4 = inlined_call_operand.vmem [shape: f32[32,32], index: 4, kind: input, shape index: {}]
  %s5 = inlined_call_operand.vmem [shape: f32[32,1], index: 5, kind: input, shape index: {}]
  %s6 = inlined_call_operand.vmem [shape: f32[1,32], index: 6, kind: input, shape index: {}]
  %s7 = inlined_call_operand.<no memory space> [shape: f32[1,1], index: 7, kind: input, shape index: {}]
  %s8 = inlined_call_operand.hbm [shape: f32[1,128], index: 8, kind: output, shape index: {}]
  %s9 = sld [smem:[#allocation0]]
  $region42: #{tpu_custom_call.1} parent=0
    _
  %s11 = ssub.s32 1, %s9
  %s12 = scalar_select 0, %s11, %s9
  %13 = sst [smem:[#allocation2]] %s7
  $region1: #{tpu_custom_call.1} parent=0
    #allocation3 [shape = 'u8[512]{0}', space=vmem, size = 0x400, scoped, tag = 'output window, operand 0, single buffered']
    #allocation4 [shape = 's32[1]{0}', space=sflag, size = 0x4, scoped, tag = 'scoped memory for tpu_custom_call.1']
    %14 = vsyncpa [#allocation4], 0
    // Predicated region
    $region2: #{tpu_custom_call.1} parent=1 // pred_check
      _
    $region3: #{tpu_custom_call.1} parent=1 // pred_check_branch
      %16 = sbr.rel (0) target = $region5
    $region4: #{tpu_custom_call.1} parent=1 // pred_region
      _
    $region5: #{tpu_custom_call.1} parent=1 // pred_fallthru
      _
    // Predicated region
    $region6: #{tpu_custom_call.1} parent=1 // pred_check
      _
    $region7: #{tpu_custom_call.1} parent=1 // pred_check_branch
      %18 = sbr.rel (0) target = $region9
    $region8: #{tpu_custom_call.1} parent=1 // pred_region
      _
    $region9: #{tpu_custom_call.1} parent=1 // pred_fallthru
      _
    // Predicated region
    $region10: #{tpu_custom_call.1} parent=1 // pred_check
      _
    $region11: #{tpu_custom_call.1} parent=1 // pred_check_branch
      %20 = sbr.rel (0) target = $region13
    $region12: #{tpu_custom_call.1} parent=1 // pred_region
      _
    $region13: #{tpu_custom_call.1} parent=1 // pred_fallthru
      _
    // Predicated region
    $region14: #{tpu_custom_call.1} parent=1 // pred_check
      _
    $region15: #{tpu_custom_call.1} parent=1 // pred_check_branch
      %22 = sbr.rel (0) target = $region17
    $region16: #{tpu_custom_call.1} parent=1 // pred_region
      _
    $region17: #{tpu_custom_call.1} parent=1 // pred_fallthru
      _
    // Predicated region
    $region18: #{tpu_custom_call.1} parent=1 // pred_check
      _
    $region19: #{tpu_custom_call.1} parent=1 // pred_check_branch
      %24 = sbr.rel (0) target = $region21
    $region20: #{tpu_custom_call.1} parent=1 // pred_region
      _
    $region21: #{tpu_custom_call.1} parent=1 // pred_fallthru
      _
    // Predicated region
    $region22: #{tpu_custom_call.1} parent=1 // pred_check
      _
    $region23: #{tpu_custom_call.1} parent=1 // pred_check_branch
      %26 = sbr.rel (0) target = $region25
    $region24: #{tpu_custom_call.1} parent=1 // pred_region
      _
    $region25: #{tpu_custom_call.1} parent=1 // pred_fallthru
      _
    // Predicated region
    $region26: #{tpu_custom_call.1} parent=1 // pred_check
      _
    $region27: #{tpu_custom_call.1} parent=1 // pred_check_branch
      %28 = sbr.rel (0) target = $region29
    $region28: #{tpu_custom_call.1} parent=1 // pred_region
      _
    $region29: #{tpu_custom_call.1} parent=1 // pred_fallthru
      _
    // Predicated region
    $region30: #{tpu_custom_call.1} parent=1 // pred_check
      _
    $region31: #{tpu_custom_call.1} parent=1 // pred_check_branch
      %30 = sbr.rel (0) target = $region33
    $region32: #{tpu_custom_call.1} parent=1 // pred_region
      _
    $region33: #{tpu_custom_call.1} parent=1 // pred_fallthru
      _
    %v31 = vld [vmem:[%s0] sm:$0x1]
    %v32 = vld [vmem:[%s1] sm:$0x1]
    %v33 = vsub.f32 %v31, %v32
    %v34 = vadd.f32 %v32, 0.1
    %v35 = vrcp.pop %v34
    %v36 = vmul.f32 %v31, %v35
    %v37 = vadd.f32 %v31, 0.1
    %v38 = vrcp.pop %v37
    %v39 = vmul.f32 %v32, %v38
    %v41 = vlaneseq
    %v42 = vshrl.u32 %v41, 7
    %v43 = vsub.s32 0, %v42
    %v44 = vrot.slane %v32, %v43
    %v47 = vlaneseq
    %v48 = vshrl.u32 %v47, 7
    %v49 = vsub.s32 0, %v48
    %v50 = vrot.slane %v33, %v49
    %v53 = vlaneseq
    %v54 = vshrl.u32 %v53, 7
    %v55 = vsub.s32 0, %v54
    %v56 = vrot.slane %v36, %v55
    %v59 = vlaneseq
    %v60 = vshrl.u32 %v59, 7
    %v61 = vsub.s32 0, %v60
    %v62 = vrot.slane %v39, %v61
    %vm64 = vcmask 1040384
    %v65 = vsel %vm64, %v31, %v44
    %vm66 = vcmask 1041408
    %v67 = vsel %vm66, %v65, %v50
    %vm68 = vcmask 1042432
    %v69 = vsel %vm68, %v67, %v56
    %vm70 = vcmask 1043456
    %v71 = vsel %vm70, %v69, %v62
    %vm72 = vcmask 1044480
    %v73 = vsel %vm72, %v71, 0.0
    %v74 = vld [vmem:[%s2] sm:$0xff]
    %v75 = vld [vmem:[%s2 + $0x8] sm:$0xff]
    %v76 = vld [vmem:[%s2 + $0x10] sm:$0xff]
    %v77 = vld [vmem:[%s2 + $0x18] sm:$0xff]
    %v78 = vld [vmem:[%s3] sm:$0xff]
    %v79 = vld [vmem:[%s3 + $0x8] sm:$0xff]
    %v80 = vld [vmem:[%s3 + $0x10] sm:$0xff]
    %v81 = vld [vmem:[%s3 + $0x18] sm:$0xff]
    %83 = vset.pattern.permute.xlu0 0
    %84 = vperm.xlu0 %83, %v78
    %v85 = vpop.permute.xlu0 %84
    %88 = vset.pattern.permute.xlu0 0
    %89 = vperm.xlu0 %88, %v79
    %v90 = vpop.permute.xlu0 %89
    %93 = vset.pattern.permute.xlu0 0
    %94 = vperm.xlu0 %93, %v80
    %v95 = vpop.permute.xlu0 %94
    %98 = vset.pattern.permute.xlu0 0
    %99 = vperm.xlu0 %98, %v81
    %v100 = vpop.permute.xlu0 %99
    %vm102 = vcmask 64512
    %v104 = vsel %vm102, %v74, 0
    %v107 = vsel %vm102, %v75, 0
    %v110 = vsel %vm102, %v76, 0
    %v113 = vsel %vm102, %v77, 0
    %115 = vmatprep.subr.mxu0 0.0
    %v116 = vand.u32 %v73, 4294901760
    %117 = vmatpush1.msra.mxu0 %v116
    %118 = vmatprep.subr.mxu0 0.0
    %119 = vmatpush1.msra.mxu0 0.0
    %120 = vmatprep.subr.mxu0 0.0
    %121 = vmatpush1.msra.mxu0 0.0
    %122 = vmatprep.subr.mxu0 0.0
    %123 = vmatpush1.msra.mxu0 0.0
    %124 = vmatprep.subr.mxu0 0.0
    %125 = vmatpush1.msra.mxu0 0.0
    %126 = vmatprep.subr.mxu0 0.0
    %127 = vmatpush1.msra.mxu0 0.0
    %128 = vmatprep.subr.mxu0 0.0
    %129 = vmatpush1.msra.mxu0 0.0
    %130 = vmatprep.subr.mxu0 0.0
    %131 = vmatpush1.msra.mxu0 0.0
    %132 = vmatprep.subr.mxu0 0.0
    %133 = vmatpush1.msra.mxu0 0.0
    %134 = vmatprep.subr.mxu0 0.0
    %135 = vmatpush1.msra.mxu0 0.0
    %136 = vmatprep.subr.mxu0 0.0
    %137 = vmatpush1.msra.mxu0 0.0
    %138 = vmatprep.subr.mxu0 0.0
    %139 = vmatpush1.msra.mxu0 0.0
    %140 = vmatprep.subr.mxu0 0.0
    %141 = vmatpush1.msra.mxu0 0.0
    %142 = vmatprep.subr.mxu0 0.0
    %143 = vmatpush1.msra.mxu0 0.0
    %144 = vmatprep.subr.mxu0 0.0
    %145 = vmatpush1.msra.mxu0 0.0
    %146 = vmatprep.subr.mxu0 0.0
    %147 = vmatpush1.msra.mxu0 0.0
    %148 = vmatprep.subr.mxu0 0.0
    %149 = vmatpush1.msra.mxu0 0.0
    %150 = vmatprep.subr.mxu0 0.0
    %151 = vmatpush1.msra.mxu0 0.0
    %152 = vmatprep.subr.mxu0 0.0
    %153 = vmatpush1.msra.mxu0 0.0
    %154 = vmatprep.subr.mxu0 0.0
    %155 = vmatpush1.msra.mxu0 0.0
    %156 = vmatprep.subr.mxu0 0.0
    %157 = vmatpush1.msra.mxu0 0.0
    %158 = vmatprep.subr.mxu0 0.0
    %159 = vmatpush1.msra.mxu0 0.0
    %160 = vmatprep.subr.mxu0 0.0
    %161 = vmatpush1.msra.mxu0 0.0
    %162 = vmatprep.subr.mxu0 0.0
    %163 = vmatpush1.msra.mxu0 0.0
    %164 = vmatprep.subr.mxu0 0.0
    %165 = vmatpush1.msra.mxu0 0.0
    %166 = vmatprep.subr.mxu0 0.0
    %167 = vmatpush1.msra.mxu0 0.0
    %168 = vmatprep.subr.mxu0 0.0
    %169 = vmatpush1.msra.mxu0 0.0
    %170 = vmatprep.subr.mxu0 0.0
    %171 = vmatpush1.msra.mxu0 0.0
    %172 = vmatprep.subr.mxu0 0.0
    %173 = vmatpush1.msra.mxu0 0.0
    %174 = vmatprep.subr.mxu0 0.0
    %175 = vmatpush1.msra.mxu0 0.0
    %176 = vmatprep.subr.mxu0 0.0
    %177 = vmatpush1.msra.mxu0 0.0
    %178 = vmatprep.subr.mxu0 0.0
    %179 = vmatpush1.msra.mxu0 0.0
    %180 = vmatprep.mubr.f32.mxu0 0.0
    %v181 = vand.u32 %v104, 4294901760
    %v182 = vsub.f32 %v104, %v181
    %v183 = vand.u32 %v182, 4294901760
    %v184 = vsub.f32 %v182, %v183
    %v185 = vand.u32 %v184, 4294901760
    %186 = vmatmul.mubr.f32.gmra.mrb[0].mxu0 %v185
    %v187 = vpop.f32.mrb[0].mxu0
    %v188 = vadd.f32 %v85, %v187
    %v189 = vpop.f32.mrb[0].mxu0
    %190 = vmatprep.mubr.f32.mxu0 0.0
    %v191 = vand.u32 %v107, 4294901760
    %v192 = vsub.f32 %v107, %v191
    %v193 = vand.u32 %v192, 4294901760
    %v194 = vsub.f32 %v192, %v193
    %v195 = vand.u32 %v194, 4294901760
    %196 = vmatmul.mubr.f32.gmra.mrb[0].mxu0 %v195
    %v197 = vpop.f32.mrb[0].mxu0
    %v198 = vadd.f32 %v90, %v197
    %v199 = vpop.f32.mrb[0].mxu0
    %200 = vmatprep.mubr.f32.mxu0 0.0
    %v201 = vand.u32 %v110, 4294901760
    %v202 = vsub.f32 %v110, %v201
    %v203 = vand.u32 %v202, 4294901760
    %v204 = vsub.f32 %v202, %v203
    %v205 = vand.u32 %v204, 4294901760
    %206 = vmatmul.mubr.f32.gmra.mrb[0].mxu0 %v205
    %v207 = vpop.f32.mrb[0].mxu0
    %v208 = vadd.f32 %v95, %v207
    %v209 = vpop.f32.mrb[0].mxu0
    %210 = vmatprep.mubr.f32.mxu0 0.0
    %v211 = vand.u32 %v113, 4294901760
    %v212 = vsub.f32 %v113, %v211
    %v213 = vand.u32 %v212, 4294901760
    %v214 = vsub.f32 %v212, %v213
    %v215 = vand.u32 %v214, 4294901760
    %216 = vmatmul.mubr.f32.gmra.mrb[0].mxu0 %v215
    %v217 = vpop.f32.mrb[0].mxu0
    %v218 = vadd.f32 %v100, %v217
    %v219 = vpop.f32.mrb[0].mxu0
    %220 = vdwg.mxu0
    %221 = vmatprep.subr.mxu0 0.0
    %v222 = vand.u32 %v73, 4294901760
    %v223 = vsub.f32 %v73, %v222
    %v224 = vand.u32 %v223, 4294901760
    %v225 = vsub.f32 %v223, %v224
    %v226 = vand.u32 %v225, 4294901760
    %227 = vmatpush1.msra.mxu0 %v226
    %228 = vmatprep.subr.mxu0 0.0
    %229 = vmatpush1.msra.mxu0 0.0
    %230 = vmatprep.subr.mxu0 0.0
    %231 = vmatpush1.msra.mxu0 0.0
    %232 = vmatprep.subr.mxu0 0.0
    %233 = vmatpush1.msra.mxu0 0.0
    %234 = vmatprep.subr.mxu0 0.0
    %235 = vmatpush1.msra.mxu0 0.0
    %236 = vmatprep.subr.mxu0 0.0
    %237 = vmatpush1.msra.mxu0 0.0
    %238 = vmatprep.subr.mxu0 0.0
    %239 = vmatpush1.msra.mxu0 0.0
    %240 = vmatprep.subr.mxu0 0.0
    %241 = vmatpush1.msra.mxu0 0.0
    %242 = vmatprep.subr.mxu0 0.0
    %243 = vmatpush1.msra.mxu0 0.0
    %244 = vmatprep.subr.mxu0 0.0
    %245 = vmatpush1.msra.mxu0 0.0
    %246 = vmatprep.subr.mxu0 0.0
    %247 = vmatpush1.msra.mxu0 0.0
    %248 = vmatprep.subr.mxu0 0.0
    %249 = vmatpush1.msra.mxu0 0.0
    %250 = vmatprep.subr.mxu0 0.0
    %251 = vmatpush1.msra.mxu0 0.0
    %252 = vmatprep.subr.mxu0 0.0
    %253 = vmatpush1.msra.mxu0 0.0
    %254 = vmatprep.subr.mxu0 0.0
    %255 = vmatpush1.msra.mxu0 0.0
    %256 = vmatprep.subr.mxu0 0.0
    %257 = vmatpush1.msra.mxu0 0.0
    %258 = vmatprep.subr.mxu0 0.0
    %259 = vmatpush1.msra.mxu0 0.0
    %260 = vmatprep.subr.mxu0 0.0
    %261 = vmatpush1.msra.mxu0 0.0
    %262 = vmatprep.subr.mxu0 0.0
    %263 = vmatpush1.msra.mxu0 0.0
    %264 = vmatprep.subr.mxu0 0.0
    %265 = vmatpush1.msra.mxu0 0.0
    %266 = vmatprep.subr.mxu0 0.0
    %267 = vmatpush1.msra.mxu0 0.0
    %268 = vmatprep.subr.mxu0 0.0
    %269 = vmatpush1.msra.mxu0 0.0
    %270 = vmatprep.subr.mxu0 0.0
    %271 = vmatpush1.msra.mxu0 0.0
    %272 = vmatprep.subr.mxu0 0.0
    %273 = vmatpush1.msra.mxu0 0.0
    %274 = vmatprep.subr.mxu0 0.0
    %275 = vmatpush1.msra.mxu0 0.0
    %276 = vmatprep.subr.mxu0 0.0
    %277 = vmatpush1.msra.mxu0 0.0
    %278 = vmatprep.subr.mxu0 0.0
    %279 = vmatpush1.msra.mxu0 0.0
    %280 = vmatprep.subr.mxu0 0.0
    %281 = vmatpush1.msra.mxu0 0.0
    %282 = vmatprep.subr.mxu0 0.0
    %283 = vmatpush1.msra.mxu0 0.0
    %284 = vmatprep.subr.mxu0 0.0
    %285 = vmatpush1.msra.mxu0 0.0
    %286 = vmatprep.subr.mxu0 0.0
    %287 = vmatpush1.msra.mxu0 0.0
    %288 = vmatprep.subr.mxu0 0.0
    %289 = vmatpush1.msra.mxu0 0.0
    %290 = vmatprep.mubr.f32.mxu0 0.0
    %v291 = vand.u32 %v104, 4294901760
    %292 = vmatmul.mubr.f32.gmra.mrb[0].mxu0 %v291
    %v293 = vpop.f32.mrb[0].mxu0
    %v294 = vadd.f32 %v188, %v293
    %v295 = vpop.f32.mrb[0].mxu0
    %296 = vmatprep.mubr.f32.mxu0 0.0
    %v297 = vand.u32 %v107, 4294901760
    %298 = vmatmul.mubr.f32.gmra.mrb[0].mxu0 %v297
    %v299 = vpop.f32.mrb[0].mxu0
    %v300 = vadd.f32 %v198, %v299
    %v301 = vpop.f32.mrb[0].mxu0
    %302 = vmatprep.mubr.f32.mxu0 0.0
    %v303 = vand.u32 %v110, 4294901760
    %304 = vmatmul.mubr.f32.gmra.mrb[0].mxu0 %v303
    %v305 = vpop.f32.mrb[0].mxu0
    %v306 = vadd.f32 %v208, %v305
    %v307 = vpop.f32.mrb[0].mxu0
    %308 = vmatprep.mubr.f32.mxu0 0.0
    %v309 = vand.u32 %v113, 4294901760
    %310 = vmatmul.mubr.f32.gmra.mrb[0].mxu0 %v309
    %v311 = vpop.f32.mrb[0].mxu0
    %v312 = vadd.f32 %v218, %v311
    %v313 = vpop.f32.mrb[0].mxu0
    %314 = vdwg.mxu0
    %315 = vmatprep.subr.mxu0 0.0
    %v316 = vand.u32 %v73, 4294901760
    %v317 = vsub.f32 %v73, %v316
    %318 = vmatpush1.msra.mxu0 %v317
    %319 = vmatprep.subr.mxu0 0.0
    %320 = vmatpush1.msra.mxu0 0.0
    %321 = vmatprep.subr.mxu0 0.0
    %322 = vmatpush1.msra.mxu0 0.0
    %323 = vmatprep.subr.mxu0 0.0
    %324 = vmatpush1.msra.mxu0 0.0
    %325 = vmatprep.subr.mxu0 0.0
    %326 = vmatpush1.msra.mxu0 0.0
    %327 = vmatprep.subr.mxu0 0.0
    %328 = vmatpush1.msra.mxu0 0.0
    %329 = vmatprep.subr.mxu0 0.0
    %330 = vmatpush1.msra.mxu0 0.0
    %331 = vmatprep.subr.mxu0 0.0
    %332 = vmatpush1.msra.mxu0 0.0
    %333 = vmatprep.subr.mxu0 0.0
    %334 = vmatpush1.msra.mxu0 0.0
    %335 = vmatprep.subr.mxu0 0.0
    %336 = vmatpush1.msra.mxu0 0.0
    %337 = vmatprep.subr.mxu0 0.0
    %338 = vmatpush1.msra.mxu0 0.0
    %339 = vmatprep.subr.mxu0 0.0
    %340 = vmatpush1.msra.mxu0 0.0
    %341 = vmatprep.subr.mxu0 0.0
    %342 = vmatpush1.msra.mxu0 0.0
    %343 = vmatprep.subr.mxu0 0.0
    %344 = vmatpush1.msra.mxu0 0.0
    %345 = vmatprep.subr.mxu0 0.0
    %346 = vmatpush1.msra.mxu0 0.0
    %347 = vmatprep.subr.mxu0 0.0
    %348 = vmatpush1.msra.mxu0 0.0
    %349 = vmatprep.subr.mxu0 0.0
    %350 = vmatpush1.msra.mxu0 0.0
    %351 = vmatprep.subr.mxu0 0.0
    %352 = vmatpush1.msra.mxu0 0.0
    %353 = vmatprep.subr.mxu0 0.0
    %354 = vmatpush1.msra.mxu0 0.0
    %355 = vmatprep.subr.mxu0 0.0
    %356 = vmatpush1.msra.mxu0 0.0
    %357 = vmatprep.subr.mxu0 0.0
    %358 = vmatpush1.msra.mxu0 0.0
    %359 = vmatprep.subr.mxu0 0.0
    %360 = vmatpush1.msra.mxu0 0.0
    %361 = vmatprep.subr.mxu0 0.0
    %362 = vmatpush1.msra.mxu0 0.0
    %363 = vmatprep.subr.mxu0 0.0
    %364 = vmatpush1.msra.mxu0 0.0
    %365 = vmatprep.subr.mxu0 0.0
    %366 = vmatpush1.msra.mxu0 0.0
    %367 = vmatprep.subr.mxu0 0.0
    %368 = vmatpush1.msra.mxu0 0.0
    %369 = vmatprep.subr.mxu0 0.0
    %370 = vmatpush1.msra.mxu0 0.0
    %371 = vmatprep.subr.mxu0 0.0
    %372 = vmatpush1.msra.mxu0 0.0
    %373 = vmatprep.subr.mxu0 0.0
    %374 = vmatpush1.msra.mxu0 0.0
    %375 = vmatprep.subr.mxu0 0.0
    %376 = vmatpush1.msra.mxu0 0.0
    %377 = vmatprep.subr.mxu0 0.0
    %378 = vmatpush1.msra.mxu0 0.0
    %379 = vmatprep.subr.mxu0 0.0
    %380 = vmatpush1.msra.mxu0 0.0
    %381 = vmatprep.mubr.f32.mxu0 0.0
    %v382 = vand.u32 %v104, 4294901760
    %v383 = vsub.f32 %v104, %v382
    %384 = vmatmul.mubr.f32.gmra.mrb[0].mxu0 %v383
    %v385 = vpop.f32.mrb[0].mxu0
    %v386 = vadd.f32 %v294, %v385
    %v387 = vpop.f32.mrb[0].mxu0
    %388 = vmatprep.mubr.f32.mxu0 0.0
    %v389 = vand.u32 %v107, 4294901760
    %v390 = vsub.f32 %v107, %v389
    %391 = vmatmul.mubr.f32.gmra.mrb[0].mxu0 %v390
    %v392 = vpop.f32.mrb[0].mxu0
    %v393 = vadd.f32 %v300, %v392
    %v394 = vpop.f32.mrb[0].mxu0
    %395 = vmatprep.mubr.f32.mxu0 0.0
    %v396 = vand.u32 %v110, 4294901760
    %v397 = vsub.f32 %v110, %v396
    %398 = vmatmul.mubr.f32.gmra.mrb[0].mxu0 %v397
    %v399 = vpop.f32.mrb[0].mxu0
    %v400 = vadd.f32 %v306, %v399
    %v401 = vpop.f32.mrb[0].mxu0
    %402 = vmatprep.mubr.f32.mxu0 0.0
    %v403 = vand.u32 %v113, 4294901760
    %v404 = vsub.f32 %v113, %v403
    %405 = vmatmul.mubr.f32.gmra.mrb[0].mxu0 %v404
    %v406 = vpop.f32.mrb[0].mxu0
    %v407 = vadd.f32 %v312, %v406
    %v408 = vpop.f32.mrb[0].mxu0
    %409 = vdwg.mxu0
    %410 = vmatprep.subr.mxu0 0.0
    %v411 = vand.u32 %v73, 4294901760
    %412 = vmatpush1.msra.mxu0 %v411
    %413 = vmatprep.subr.mxu0 0.0
    %414 = vmatpush1.msra.mxu0 0.0
    %415 = vmatprep.subr.mxu0 0.0
    %416 = vmatpush1.msra.mxu0 0.0
    %417 = vmatprep.subr.mxu0 0.0
    %418 = vmatpush1.msra.mxu0 0.0
    %419 = vmatprep.subr.mxu0 0.0
    %420 = vmatpush1.msra.mxu0 0.0
    %421 = vmatprep.subr.mxu0 0.0
    %422 = vmatpush1.msra.mxu0 0.0
    %423 = vmatprep.subr.mxu0 0.0
    %424 = vmatpush1.msra.mxu0 0.0
    %425 = vmatprep.subr.mxu0 0.0
    %426 = vmatpush1.msra.mxu0 0.0
    %427 = vmatprep.subr.mxu0 0.0
    %428 = vmatpush1.msra.mxu0 0.0
    %429 = vmatprep.subr.mxu0 0.0
    %430 = vmatpush1.msra.mxu0 0.0
    %431 = vmatprep.subr.mxu0 0.0
    %432 = vmatpush1.msra.mxu0 0.0
    %433 = vmatprep.subr.mxu0 0.0
    %434 = vmatpush1.msra.mxu0 0.0
    %435 = vmatprep.subr.mxu0 0.0
    %436 = vmatpush1.msra.mxu0 0.0
    %437 = vmatprep.subr.mxu0 0.0
    %438 = vmatpush1.msra.mxu0 0.0
    %439 = vmatprep.subr.mxu0 0.0
    %440 = vmatpush1.msra.mxu0 0.0
    %441 = vmatprep.subr.mxu0 0.0
    %442 = vmatpush1.msra.mxu0 0.0
    %443 = vmatprep.subr.mxu0 0.0
    %444 = vmatpush1.msra.mxu0 0.0
    %445 = vmatprep.subr.mxu0 0.0
    %446 = vmatpush1.msra.mxu0 0.0
    %447 = vmatprep.subr.mxu0 0.0
    %448 = vmatpush1.msra.mxu0 0.0
    %449 = vmatprep.subr.mxu0 0.0
    %450 = vmatpush1.msra.mxu0 0.0
    %451 = vmatprep.subr.mxu0 0.0
    %452 = vmatpush1.msra.mxu0 0.0
    %453 = vmatprep.subr.mxu0 0.0
    %454 = vmatpush1.msra.mxu0 0.0
    %455 = vmatprep.subr.mxu0 0.0
    %456 = vmatpush1.msra.mxu0 0.0
    %457 = vmatprep.subr.mxu0 0.0
    %458 = vmatpush1.msra.mxu0 0.0
    %459 = vmatprep.subr.mxu0 0.0
    %460 = vmatpush1.msra.mxu0 0.0
    %461 = vmatprep.subr.mxu0 0.0
    %462 = vmatpush1.msra.mxu0 0.0
    %463 = vmatprep.subr.mxu0 0.0
    %464 = vmatpush1.msra.mxu0 0.0
    %465 = vmatprep.subr.mxu0 0.0
    %466 = vmatpush1.msra.mxu0 0.0
    %467 = vmatprep.subr.mxu0 0.0
    %468 = vmatpush1.msra.mxu0 0.0
    %469 = vmatprep.subr.mxu0 0.0
    %470 = vmatpush1.msra.mxu0 0.0
    %471 = vmatprep.subr.mxu0 0.0
    %472 = vmatpush1.msra.mxu0 0.0
    %473 = vmatprep.subr.mxu0 0.0
    %474 = vmatpush1.msra.mxu0 0.0
    %475 = vmatprep.mubr.f32.mxu0 0.0
    %v476 = vand.u32 %v104, 4294901760
    %v477 = vsub.f32 %v104, %v476
    %v478 = vand.u32 %v477, 4294901760
    %479 = vmatmul.mubr.f32.gmra.mrb[0].mxu0 %v478
    %v480 = vpop.f32.mrb[0].mxu0
    %v481 = vadd.f32 %v386, %v480
    %v482 = vpop.f32.mrb[0].mxu0
    %483 = vmatprep.mubr.f32.mxu0 0.0
    %v484 = vand.u32 %v107, 4294901760
    %v485 = vsub.f32 %v107, %v484
    %v486 = vand.u32 %v485, 4294901760
    %487 = vmatmul.mubr.f32.gmra.mrb[0].mxu0 %v486
    %v488 = vpop.f32.mrb[0].mxu0
    %v489 = vadd.f32 %v393, %v488
    %v490 = vpop.f32.mrb[0].mxu0
    %491 = vmatprep.mubr.f32.mxu0 0.0
    %v492 = vand.u32 %v110, 4294901760
    %v493 = vsub.f32 %v110, %v492
    %v494 = vand.u32 %v493, 4294901760
    %495 = vmatmul.mubr.f32.gmra.mrb[0].mxu0 %v494
    %v496 = vpop.f32.mrb[0].mxu0
    %v497 = vadd.f32 %v400, %v496
    %v498 = vpop.f32.mrb[0].mxu0
    %499 = vmatprep.mubr.f32.mxu0 0.0
    %v500 = vand.u32 %v113, 4294901760
    %v501 = vsub.f32 %v113, %v500
    %v502 = vand.u32 %v501, 4294901760
    %503 = vmatmul.mubr.f32.gmra.mrb[0].mxu0 %v502
    %v504 = vpop.f32.mrb[0].mxu0
    %v505 = vadd.f32 %v407, %v504
    %v506 = vpop.f32.mrb[0].mxu0
    %507 = vdwg.mxu0
    %508 = vmatprep.subr.mxu0 0.0
    %v509 = vand.u32 %v73, 4294901760
    %v510 = vsub.f32 %v73, %v509
    %v511 = vand.u32 %v510, 4294901760
    %512 = vmatpush1.msra.mxu0 %v511
    %513 = vmatprep.subr.mxu0 0.0
    %514 = vmatpush1.msra.mxu0 0.0
    %515 = vmatprep.subr.mxu0 0.0
    %516 = vmatpush1.msra.mxu0 0.0
    %517 = vmatprep.subr.mxu0 0.0
    %518 = vmatpush1.msra.mxu0 0.0
    %519 = vmatprep.subr.mxu0 0.0
    %520 = vmatpush1.msra.mxu0 0.0
    %521 = vmatprep.subr.mxu0 0.0
    %522 = vmatpush1.msra.mxu0 0.0
    %523 = vmatprep.subr.mxu0 0.0
    %524 = vmatpush1.msra.mxu0 0.0
    %525 = vmatprep.subr.mxu0 0.0
    %526 = vmatpush1.msra.mxu0 0.0
    %527 = vmatprep.subr.mxu0 0.0
    %528 = vmatpush1.msra.mxu0 0.0
    %529 = vmatprep.subr.mxu0 0.0
    %530 = vmatpush1.msra.mxu0 0.0
    %531 = vmatprep.subr.mxu0 0.0
    %532 = vmatpush1.msra.mxu0 0.0
    %533 = vmatprep.subr.mxu0 0.0
    %534 = vmatpush1.msra.mxu0 0.0
    %535 = vmatprep.subr.mxu0 0.0
    %536 = vmatpush1.msra.mxu0 0.0
    %537 = vmatprep.subr.mxu0 0.0
    %538 = vmatpush1.msra.mxu0 0.0
    %539 = vmatprep.subr.mxu0 0.0
    %540 = vmatpush1.msra.mxu0 0.0
    %541 = vmatprep.subr.mxu0 0.0
    %542 = vmatpush1.msra.mxu0 0.0
    %543 = vmatprep.subr.mxu0 0.0
    %544 = vmatpush1.msra.mxu0 0.0
    %545 = vmatprep.subr.mxu0 0.0
    %546 = vmatpush1.msra.mxu0 0.0
    %547 = vmatprep.subr.mxu0 0.0
    %548 = vmatpush1.msra.mxu0 0.0
    %549 = vmatprep.subr.mxu0 0.0
    %550 = vmatpush1.msra.mxu0 0.0
    %551 = vmatprep.subr.mxu0 0.0
    %552 = vmatpush1.msra.mxu0 0.0
    %553 = vmatprep.subr.mxu0 0.0
    %554 = vmatpush1.msra.mxu0 0.0
    %555 = vmatprep.subr.mxu0 0.0
    %556 = vmatpush1.msra.mxu0 0.0
    %557 = vmatprep.subr.mxu0 0.0
    %558 = vmatpush1.msra.mxu0 0.0
    %559 = vmatprep.subr.mxu0 0.0
    %560 = vmatpush1.msra.mxu0 0.0
    %561 = vmatprep.subr.mxu0 0.0
    %562 = vmatpush1.msra.mxu0 0.0
    %563 = vmatprep.subr.mxu0 0.0
    %564 = vmatpush1.msra.mxu0 0.0
    %565 = vmatprep.subr.mxu0 0.0
    %566 = vmatpush1.msra.mxu0 0.0
    %567 = vmatprep.subr.mxu0 0.0
    %568 = vmatpush1.msra.mxu0 0.0
    %569 = vmatprep.subr.mxu0 0.0
    %570 = vmatpush1.msra.mxu0 0.0
    %571 = vmatprep.subr.mxu0 0.0
    %572 = vmatpush1.msra.mxu0 0.0
    %573 = vmatprep.subr.mxu0 0.0
    %574 = vmatpush1.msra.mxu0 0.0
    %575 = vmatprep.mubr.f32.mxu0 0.0
    %v576 = vand.u32 %v104, 4294901760
    %577 = vmatmul.mubr.f32.gmra.mrb[0].mxu0 %v576
    %v578 = vpop.f32.mrb[0].mxu0
    %v579 = vadd.f32 %v481, %v578
    %v580 = vpop.f32.mrb[0].mxu0
    %581 = vmatprep.mubr.f32.mxu0 0.0
    %v582 = vand.u32 %v107, 4294901760
    %583 = vmatmul.mubr.f32.gmra.mrb[0].mxu0 %v582
    %v584 = vpop.f32.mrb[0].mxu0
    %v585 = vadd.f32 %v489, %v584
    %v586 = vpop.f32.mrb[0].mxu0
    %587 = vmatprep.mubr.f32.mxu0 0.0
    %v588 = vand.u32 %v110, 4294901760
    %589 = vmatmul.mubr.f32.gmra.mrb[0].mxu0 %v588
    %v590 = vpop.f32.mrb[0].mxu0
    %v591 = vadd.f32 %v497, %v590
    %v592 = vpop.f32.mrb[0].mxu0
    %593 = vmatprep.mubr.f32.mxu0 0.0
    %v594 = vand.u32 %v113, 4294901760
    %595 = vmatmul.mubr.f32.gmra.mrb[0].mxu0 %v594
    %v596 = vpop.f32.mrb[0].mxu0
    %v597 = vadd.f32 %v505, %v596
    %v598 = vpop.f32.mrb[0].mxu0
    %599 = vdwg.mxu0
    %600 = vmatprep.subr.mxu0 0.0
    %v601 = vand.u32 %v73, 4294901760
    %602 = vmatpush1.msra.mxu0 %v601
    %603 = vmatprep.subr.mxu0 0.0
    %604 = vmatpush1.msra.mxu0 0.0
    %605 = vmatprep.subr.mxu0 0.0
    %606 = vmatpush1.msra.mxu0 0.0
    %607 = vmatprep.subr.mxu0 0.0
    %608 = vmatpush1.msra.mxu0 0.0
    %609 = vmatprep.subr.mxu0 0.0
    %610 = vmatpush1.msra.mxu0 0.0
    %611 = vmatprep.subr.mxu0 0.0
    %612 = vmatpush1.msra.mxu0 0.0
    %613 = vmatprep.subr.mxu0 0.0
    %614 = vmatpush1.msra.mxu0 0.0
    %615 = vmatprep.subr.mxu0 0.0
    %616 = vmatpush1.msra.mxu0 0.0
    %617 = vmatprep.subr.mxu0 0.0
    %618 = vmatpush1.msra.mxu0 0.0
    %619 = vmatprep.subr.mxu0 0.0
    %620 = vmatpush1.msra.mxu0 0.0
    %621 = vmatprep.subr.mxu0 0.0
    %622 = vmatpush1.msra.mxu0 0.0
    %623 = vmatprep.subr.mxu0 0.0
    %624 = vmatpush1.msra.mxu0 0.0
    %625 = vmatprep.subr.mxu0 0.0
    %626 = vmatpush1.msra.mxu0 0.0
    %627 = vmatprep.subr.mxu0 0.0
    %628 = vmatpush1.msra.mxu0 0.0
    %629 = vmatprep.subr.mxu0 0.0
    %630 = vmatpush1.msra.mxu0 0.0
    %631 = vmatprep.subr.mxu0 0.0
    %632 = vmatpush1.msra.mxu0 0.0
    %633 = vmatprep.subr.mxu0 0.0
    %634 = vmatpush1.msra.mxu0 0.0
    %635 = vmatprep.subr.mxu0 0.0
    %636 = vmatpush1.msra.mxu0 0.0
    %637 = vmatprep.subr.mxu0 0.0
    %638 = vmatpush1.msra.mxu0 0.0
    %639 = vmatprep.subr.mxu0 0.0
    %640 = vmatpush1.msra.mxu0 0.0
    %641 = vmatprep.subr.mxu0 0.0
    %642 = vmatpush1.msra.mxu0 0.0
    %643 = vmatprep.subr.mxu0 0.0
    %644 = vmatpush1.msra.mxu0 0.0
    %645 = vmatprep.subr.mxu0 0.0
    %646 = vmatpush1.msra.mxu0 0.0
    %647 = vmatprep.subr.mxu0 0.0
    %648 = vmatpush1.msra.mxu0 0.0
    %649 = vmatprep.subr.mxu0 0.0
    %650 = vmatpush1.msra.mxu0 0.0
    %651 = vmatprep.subr.mxu0 0.0
    %652 = vmatpush1.msra.mxu0 0.0
    %653 = vmatprep.subr.mxu0 0.0
    %654 = vmatpush1.msra.mxu0 0.0
    %655 = vmatprep.subr.mxu0 0.0
    %656 = vmatpush1.msra.mxu0 0.0
    %657 = vmatprep.subr.mxu0 0.0
    %658 = vmatpush1.msra.mxu0 0.0
    %659 = vmatprep.subr.mxu0 0.0
    %660 = vmatpush1.msra.mxu0 0.0
    %661 = vmatprep.subr.mxu0 0.0
    %662 = vmatpush1.msra.mxu0 0.0
    %663 = vmatprep.subr.mxu0 0.0
    %664 = vmatpush1.msra.mxu0 0.0
    %665 = vmatprep.mubr.f32.mxu0 0.0
    %v666 = vand.u32 %v104, 4294901760
    %667 = vmatmul.mubr.f32.gmra.mrb[0].mxu0 %v666
    %v668 = vpop.f32.mrb[0].mxu0
    %v669 = vadd.f32 %v579, %v668
    %v670 = vpop.f32.mrb[0].mxu0
    %671 = vmatprep.mubr.f32.mxu0 0.0
    %v672 = vand.u32 %v107, 4294901760
    %673 = vmatmul.mubr.f32.gmra.mrb[0].mxu0 %v672
    %v674 = vpop.f32.mrb[0].mxu0
    %v675 = vadd.f32 %v585, %v674
    %v676 = vpop.f32.mrb[0].mxu0
    %677 = vmatprep.mubr.f32.mxu0 0.0
    %v678 = vand.u32 %v110, 4294901760
    %679 = vmatmul.mubr.f32.gmra.mrb[0].mxu0 %v678
    %v680 = vpop.f32.mrb[0].mxu0
    %v681 = vadd.f32 %v591, %v680
    %v682 = vpop.f32.mrb[0].mxu0
    %683 = vmatprep.mubr.f32.mxu0 0.0
    %v684 = vand.u32 %v113, 4294901760
    %685 = vmatmul.mubr.f32.gmra.mrb[0].mxu0 %v684
    %v686 = vpop.f32.mrb[0].mxu0
    %v687 = vadd.f32 %v597, %v686
    %v688 = vpop.f32.mrb[0].mxu0
    %689 = vdwg.mxu0
    %v690 = vmul.f32 %v669, 0.2
    %v691 = vmul.f32 %v675, 0.2
    %v692 = vmul.f32 %v681, 0.2
    %v693 = vmul.f32 %v687, 0.2
    %v694 = vmax.f32 %v669, %v690
    %v695 = vmax.f32 %v675, %v691
    %v696 = vmax.f32 %v681, %v692
    %v697 = vmax.f32 %v687, %v693
    %v698 = vld [vmem:[%s4] sm:$0xff]
    %v699 = vld [vmem:[%s4 + $0x8] sm:$0xff]
    %v700 = vld [vmem:[%s4 + $0x10] sm:$0xff]
    %v701 = vld [vmem:[%s4 + $0x18] sm:$0xff]
    %v702 = vld [vmem:[%s5] sm:$0xff]
    %v703 = vld [vmem:[%s5 + $0x8] sm:$0xff]
    %v704 = vld [vmem:[%s5 + $0x10] sm:$0xff]
    %v705 = vld [vmem:[%s5 + $0x18] sm:$0xff]
    %707 = vset.pattern.permute.xlu0 0
    %708 = vperm.xlu0 %707, %v702
    %v709 = vpop.permute.xlu0 %708
    %712 = vset.pattern.permute.xlu0 0
    %713 = vperm.xlu0 %712, %v703
    %v714 = vpop.permute.xlu0 %713
    %717 = vset.pattern.permute.xlu0 0
    %718 = vperm.xlu0 %717, %v704
    %v719 = vpop.permute.xlu0 %718
    %722 = vset.pattern.permute.xlu0 0
    %723 = vperm.xlu0 %722, %v705
    %v724 = vpop.permute.xlu0 %723
    %vm726 = vcmask 261120
    %v728 = vsel %vm726, %v698, 0
    %v731 = vsel %vm726, %v699, 0
    %v734 = vsel %vm726, %v700, 0
    %v737 = vsel %vm726, %v701, 0
    %739 = vmatprep.subr.mxu0 0.0
    %v740 = vand.u32 %v694, 4294901760
    %741 = vmatpush1.msra.mxu0 %v740
    %742 = vmatprep.subr.mxu0 0.0
    %v743 = vand.u32 %v695, 4294901760
    %744 = vmatpush1.msra.mxu0 %v743
    %745 = vmatprep.subr.mxu0 0.0
    %v746 = vand.u32 %v696, 4294901760
    %747 = vmatpush1.msra.mxu0 %v746
    %748 = vmatprep.subr.mxu0 0.0
    %v749 = vand.u32 %v697, 4294901760
    %750 = vmatpush1.msra.mxu0 %v749
    %751 = vmatprep.subr.mxu0 0.0
    %752 = vmatpush1.msra.mxu0 0.0
    %753 = vmatprep.subr.mxu0 0.0
    %754 = vmatpush1.msra.mxu0 0.0
    %755 = vmatprep.subr.mxu0 0.0
    %756 = vmatpush1.msra.mxu0 0.0
    %757 = vmatprep.subr.mxu0 0.0
    %758 = vmatpush1.msra.mxu0 0.0
    %759 = vmatprep.subr.mxu0 0.0
    %760 = vmatpush1.msra.mxu0 0.0
    %761 = vmatprep.subr.mxu0 0.0
    %762 = vmatpush1.msra.mxu0 0.0
    %763 = vmatprep.subr.mxu0 0.0
    %764 = vmatpush1.msra.mxu0 0.0
    %765 = vmatprep.subr.mxu0 0.0
    %766 = vmatpush1.msra.mxu0 0.0
    %767 = vmatprep.subr.mxu0 0.0
    %768 = vmatpush1.msra.mxu0 0.0
    %769 = vmatprep.subr.mxu0 0.0
    %770 = vmatpush1.msra.mxu0 0.0
    %771 = vmatprep.subr.mxu0 0.0
    %772 = vmatpush1.msra.mxu0 0.0
    %773 = vmatprep.subr.mxu0 0.0
    %774 = vmatpush1.msra.mxu0 0.0
    %775 = vmatprep.subr.mxu0 0.0
    %776 = vmatpush1.msra.mxu0 0.0
    %777 = vmatprep.subr.mxu0 0.0
    %778 = vmatpush1.msra.mxu0 0.0
    %779 = vmatprep.subr.mxu0 0.0
    %780 = vmatpush1.msra.mxu0 0.0
    %781 = vmatprep.subr.mxu0 0.0
    %782 = vmatpush1.msra.mxu0 0.0
    %783 = vmatprep.subr.mxu0 0.0
    %784 = vmatpush1.msra.mxu0 0.0
    %785 = vmatprep.subr.mxu0 0.0
    %786 = vmatpush1.msra.mxu0 0.0
    %787 = vmatprep.subr.mxu0 0.0
    %788 = vmatpush1.msra.mxu0 0.0
    %789 = vmatprep.subr.mxu0 0.0
    %790 = vmatpush1.msra.mxu0 0.0
    %791 = vmatprep.subr.mxu0 0.0
    %792 = vmatpush1.msra.mxu0 0.0
    %793 = vmatprep.subr.mxu0 0.0
    %794 = vmatpush1.msra.mxu0 0.0
    %795 = vmatprep.subr.mxu0 0.0
    %796 = vmatpush1.msra.mxu0 0.0
    %797 = vmatprep.subr.mxu0 0.0
    %798 = vmatpush1.msra.mxu0 0.0
    %799 = vmatprep.subr.mxu0 0.0
    %800 = vmatpush1.msra.mxu0 0.0
    %801 = vmatprep.subr.mxu0 0.0
    %802 = vmatpush1.msra.mxu0 0.0
    %803 = vmatprep.subr.mxu0 0.0
    %804 = vmatpush1.msra.mxu0 0.0
    %805 = vmatprep.subr.mxu0 0.0
    %806 = vmatpush1.msra.mxu0 0.0
    %807 = vmatprep.mubr.f32.mxu0 0.0
    %v808 = vand.u32 %v728, 4294901760
    %v809 = vsub.f32 %v728, %v808
    %v810 = vand.u32 %v809, 4294901760
    %v811 = vsub.f32 %v809, %v810
    %v812 = vand.u32 %v811, 4294901760
    %813 = vmatmul.mubr.f32.gmra.mrb[0].mxu0 %v812
    %v814 = vpop.f32.mrb[0].mxu0
    %v815 = vadd.f32 %v709, %v814
    %v816 = vpop.f32.mrb[0].mxu0
    %817 = vmatprep.mubr.f32.mxu0 0.0
    %v818 = vand.u32 %v731, 4294901760
    %v819 = vsub.f32 %v731, %v818
    %v820 = vand.u32 %v819, 4294901760
    %v821 = vsub.f32 %v819, %v820
    %v822 = vand.u32 %v821, 4294901760
    %823 = vmatmul.mubr.f32.gmra.mrb[0].mxu0 %v822
    %v824 = vpop.f32.mrb[0].mxu0
    %v825 = vadd.f32 %v714, %v824
    %v826 = vpop.f32.mrb[0].mxu0
    %827 = vmatprep.mubr.f32.mxu0 0.0
    %v828 = vand.u32 %v734, 4294901760
    %v829 = vsub.f32 %v734, %v828
    %v830 = vand.u32 %v829, 4294901760
    %v831 = vsub.f32 %v829, %v830
    %v832 = vand.u32 %v831, 4294901760
    %833 = vmatmul.mubr.f32.gmra.mrb[0].mxu0 %v832
    %v834 = vpop.f32.mrb[0].mxu0
    %v835 = vadd.f32 %v719, %v834
    %v836 = vpop.f32.mrb[0].mxu0
    %837 = vmatprep.mubr.f32.mxu0 0.0
    %v838 = vand.u32 %v737, 4294901760
    %v839 = vsub.f32 %v737, %v838
    %v840 = vand.u32 %v839, 4294901760
    %v841 = vsub.f32 %v839, %v840
    %v842 = vand.u32 %v841, 4294901760
    %843 = vmatmul.mubr.f32.gmra.mrb[0].mxu0 %v842
    %v844 = vpop.f32.mrb[0].mxu0
    %v845 = vadd.f32 %v724, %v844
    %v846 = vpop.f32.mrb[0].mxu0
    %847 = vdwg.mxu0
    %848 = vmatprep.subr.mxu0 0.0
    %v849 = vand.u32 %v694, 4294901760
    %v850 = vsub.f32 %v694, %v849
    %v851 = vand.u32 %v850, 4294901760
    %v852 = vsub.f32 %v850, %v851
    %v853 = vand.u32 %v852, 4294901760
    %854 = vmatpush1.msra.mxu0 %v853
    %855 = vmatprep.subr.mxu0 0.0
    %v856 = vand.u32 %v695, 4294901760
    %v857 = vsub.f32 %v695, %v856
    %v858 = vand.u32 %v857, 4294901760
    %v859 = vsub.f32 %v857, %v858
    %v860 = vand.u32 %v859, 4294901760
    %861 = vmatpush1.msra.mxu0 %v860
    %862 = vmatprep.subr.mxu0 0.0
    %v863 = vand.u32 %v696, 4294901760
    %v864 = vsub.f32 %v696, %v863
    %v865 = vand.u32 %v864, 4294901760
    %v866 = vsub.f32 %v864, %v865
    %v867 = vand.u32 %v866, 4294901760
    %868 = vmatpush1.msra.mxu0 %v867
    %869 = vmatprep.subr.mxu0 0.0
    %v870 = vand.u32 %v697, 4294901760
    %v871 = vsub.f32 %v697, %v870
    %v872 = vand.u32 %v871, 4294901760
    %v873 = vsub.f32 %v871, %v872
    %v874 = vand.u32 %v873, 4294901760
    %875 = vmatpush1.msra.mxu0 %v874
    %876 = vmatprep.subr.mxu0 0.0
    %877 = vmatpush1.msra.mxu0 0.0
    %878 = vmatprep.subr.mxu0 0.0
    %879 = vmatpush1.msra.mxu0 0.0
    %880 = vmatprep.subr.mxu0 0.0
    %881 = vmatpush1.msra.mxu0 0.0
    %882 = vmatprep.subr.mxu0 0.0
    %883 = vmatpush1.msra.mxu0 0.0
    %884 = vmatprep.subr.mxu0 0.0
    %885 = vmatpush1.msra.mxu0 0.0
    %886 = vmatprep.subr.mxu0 0.0
    %887 = vmatpush1.msra.mxu0 0.0
    %888 = vmatprep.subr.mxu0 0.0
    %889 = vmatpush1.msra.mxu0 0.0
    %890 = vmatprep.subr.mxu0 0.0
    %891 = vmatpush1.msra.mxu0 0.0
    %892 = vmatprep.subr.mxu0 0.0
    %893 = vmatpush1.msra.mxu0 0.0
    %894 = vmatprep.subr.mxu0 0.0
    %895 = vmatpush1.msra.mxu0 0.0
    %896 = vmatprep.subr.mxu0 0.0
    %897 = vmatpush1.msra.mxu0 0.0
    %898 = vmatprep.subr.mxu0 0.0
    %899 = vmatpush1.msra.mxu0 0.0
    %900 = vmatprep.subr.mxu0 0.0
    %901 = vmatpush1.msra.mxu0 0.0
    %902 = vmatprep.subr.mxu0 0.0
    %903 = vmatpush1.msra.mxu0 0.0
    %904 = vmatprep.subr.mxu0 0.0
    %905 = vmatpush1.msra.mxu0 0.0
    %906 = vmatprep.subr.mxu0 0.0
    %907 = vmatpush1.msra.mxu0 0.0
    %908 = vmatprep.subr.mxu0 0.0
    %909 = vmatpush1.msra.mxu0 0.0
    %910 = vmatprep.subr.mxu0 0.0
    %911 = vmatpush1.msra.mxu0 0.0
    %912 = vmatprep.subr.mxu0 0.0
    %913 = vmatpush1.msra.mxu0 0.0
    %914 = vmatprep.subr.mxu0 0.0
    %915 = vmatpush1.msra.mxu0 0.0
    %916 = vmatprep.subr.mxu0 0.0
    %917 = vmatpush1.msra.mxu0 0.0
    %918 = vmatprep.subr.mxu0 0.0
    %919 = vmatpush1.msra.mxu0 0.0
    %920 = vmatprep.subr.mxu0 0.0
    %921 = vmatpush1.msra.mxu0 0.0
    %922 = vmatprep.subr.mxu0 0.0
    %923 = vmatpush1.msra.mxu0 0.0
    %924 = vmatprep.subr.mxu0 0.0
    %925 = vmatpush1.msra.mxu0 0.0
    %926 = vmatprep.subr.mxu0 0.0
    %927 = vmatpush1.msra.mxu0 0.0
    %928 = vmatprep.subr.mxu0 0.0
    %929 = vmatpush1.msra.mxu0 0.0
    %930 = vmatprep.subr.mxu0 0.0
    %931 = vmatpush1.msra.mxu0 0.0
    %932 = vmatprep.mubr.f32.mxu0 0.0
    %v933 = vand.u32 %v728, 4294901760
    %934 = vmatmul.mubr.f32.gmra.mrb[0].mxu0 %v933
    %v935 = vpop.f32.mrb[0].mxu0
    %v936 = vadd.f32 %v815, %v935
    %v937 = vpop.f32.mrb[0].mxu0
    %938 = vmatprep.mubr.f32.mxu0 0.0
    %v939 = vand.u32 %v731, 4294901760
    %940 = vmatmul.mubr.f32.gmra.mrb[0].mxu0 %v939
    %v941 = vpop.f32.mrb[0].mxu0
    %v942 = vadd.f32 %v825, %v941
    %v943 = vpop.f32.mrb[0].mxu0
    %944 = vmatprep.mubr.f32.mxu0 0.0
    %v945 = vand.u32 %v734, 4294901760
    %946 = vmatmul.mubr.f32.gmra.mrb[0].mxu0 %v945
    %v947 = vpop.f32.mrb[0].mxu0
    %v948 = vadd.f32 %v835, %v947
    %v949 = vpop.f32.mrb[0].mxu0
    %950 = vmatprep.mubr.f32.mxu0 0.0
    %v951 = vand.u32 %v737, 4294901760
    %952 = vmatmul.mubr.f32.gmra.mrb[0].mxu0 %v951
    %v953 = vpop.f32.mrb[0].mxu0
    %v954 = vadd.f32 %v845, %v953
    %v955 = vpop.f32.mrb[0].mxu0
    %956 = vdwg.mxu0
    %957 = vmatprep.subr.mxu0 0.0
    %v958 = vand.u32 %v694, 4294901760
    %v959 = vsub.f32 %v694, %v958
    %960 = vmatpush1.msra.mxu0 %v959
    %961 = vmatprep.subr.mxu0 0.0
    %v962 = vand.u32 %v695, 4294901760
    %v963 = vsub.f32 %v695, %v962
    %964 = vmatpush1.msra.mxu0 %v963
    %965 = vmatprep.subr.mxu0 0.0
    %v966 = vand.u32 %v696, 4294901760
    %v967 = vsub.f32 %v696, %v966
    %968 = vmatpush1.msra.mxu0 %v967
    %969 = vmatprep.subr.mxu0 0.0
    %v970 = vand.u32 %v697, 4294901760
    %v971 = vsub.f32 %v697, %v970
    %972 = vmatpush1.msra.mxu0 %v971
    %973 = vmatprep.subr.mxu0 0.0
    %974 = vmatpush1.msra.mxu0 0.0
    %975 = vmatprep.subr.mxu0 0.0
    %976 = vmatpush1.msra.mxu0 0.0
    %977 = vmatprep.subr.mxu0 0.0
    %978 = vmatpush1.msra.mxu0 0.0
    %979 = vmatprep.subr.mxu0 0.0
    %980 = vmatpush1.msra.mxu0 0.0
    %981 = vmatprep.subr.mxu0 0.0
    %982 = vmatpush1.msra.mxu0 0.0
    %983 = vmatprep.subr.mxu0 0.0
    %984 = vmatpush1.msra.mxu0 0.0
    %985 = vmatprep.subr.mxu0 0.0
    %986 = vmatpush1.msra.mxu0 0.0
    %987 = vmatprep.subr.mxu0 0.0
    %988 = vmatpush1.msra.mxu0 0.0
    %989 = vmatprep.subr.mxu0 0.0
    %990 = vmatpush1.msra.mxu0 0.0
    %991 = vmatprep.subr.mxu0 0.0
    %992 = vmatpush1.msra.mxu0 0.0
    %993 = vmatprep.subr.mxu0 0.0
    %994 = vmatpush1.msra.mxu0 0.0
    %995 = vmatprep.subr.mxu0 0.0
    %996 = vmatpush1.msra.mxu0 0.0
    %997 = vmatprep.subr.mxu0 0.0
    %998 = vmatpush1.msra.mxu0 0.0
    %999 = vmatprep.subr.mxu0 0.0
    %1000 = vmatpush1.msra.mxu0 0.0
    %1001 = vmatprep.subr.mxu0 0.0
    %1002 = vmatpush1.msra.mxu0 0.0
    %1003 = vmatprep.subr.mxu0 0.0
    %1004 = vmatpush1.msra.mxu0 0.0
    %1005 = vmatprep.subr.mxu0 0.0
    %1006 = vmatpush1.msra.mxu0 0.0
    %1007 = vmatprep.subr.mxu0 0.0
    %1008 = vmatpush1.msra.mxu0 0.0
    %1009 = vmatprep.subr.mxu0 0.0
    %1010 = vmatpush1.msra.mxu0 0.0
    %1011 = vmatprep.subr.mxu0 0.0
    %1012 = vmatpush1.msra.mxu0 0.0
    %1013 = vmatprep.subr.mxu0 0.0
    %1014 = vmatpush1.msra.mxu0 0.0
    %1015 = vmatprep.subr.mxu0 0.0
    %1016 = vmatpush1.msra.mxu0 0.0
    %1017 = vmatprep.subr.mxu0 0.0
    %1018 = vmatpush1.msra.mxu0 0.0
    %1019 = vmatprep.subr.mxu0 0.0
    %1020 = vmatpush1.msra.mxu0 0.0
    %1021 = vmatprep.subr.mxu0 0.0
    %1022 = vmatpush1.msra.mxu0 0.0
    %1023 = vmatprep.subr.mxu0 0.0
    %1024 = vmatpush1.msra.mxu0 0.0
    %1025 = vmatprep.subr.mxu0 0.0
    %1026 = vmatpush1.msra.mxu0 0.0
    %1027 = vmatprep.subr.mxu0 0.0
    %1028 = vmatpush1.msra.mxu0 0.0
    %1029 = vmatprep.mubr.f32.mxu0 0.0
    %v1030 = vand.u32 %v728, 4294901760
    %v1031 = vsub.f32 %v728, %v1030
    %1032 = vmatmul.mubr.f32.gmra.mrb[0].mxu0 %v1031
    %v1033 = vpop.f32.mrb[0].mxu0
    %v1034 = vadd.f32 %v936, %v1033
    %v1035 = vpop.f32.mrb[0].mxu0
    %1036 = vmatprep.mubr.f32.mxu0 0.0
    %v1037 = vand.u32 %v731, 4294901760
    %v1038 = vsub.f32 %v731, %v1037
    %1039 = vmatmul.mubr.f32.gmra.mrb[0].mxu0 %v1038
    %v1040 = vpop.f32.mrb[0].mxu0
    %v1041 = vadd.f32 %v942, %v1040
    %v1042 = vpop.f32.mrb[0].mxu0
    %1043 = vmatprep.mubr.f32.mxu0 0.0
    %v1044 = vand.u32 %v734, 4294901760
    %v1045 = vsub.f32 %v734, %v1044
    %1046 = vmatmul.mubr.f32.gmra.mrb[0].mxu0 %v1045
    %v1047 = vpop.f32.mrb[0].mxu0
    %v1048 = vadd.f32 %v948, %v1047
    %v1049 = vpop.f32.mrb[0].mxu0
    %1050 = vmatprep.mubr.f32.mxu0 0.0
    %v1051 = vand.u32 %v737, 4294901760
    %v1052 = vsub.f32 %v737, %v1051
    %1053 = vmatmul.mubr.f32.gmra.mrb[0].mxu0 %v1052
    %v1054 = vpop.f32.mrb[0].mxu0
    %v1055 = vadd.f32 %v954, %v1054
    %v1056 = vpop.f32.mrb[0].mxu0
    %1057 = vdwg.mxu0
    %1058 = vmatprep.subr.mxu0 0.0
    %v1059 = vand.u32 %v694, 4294901760
    %1060 = vmatpush1.msra.mxu0 %v1059
    %1061 = vmatprep.subr.mxu0 0.0
    %v1062 = vand.u32 %v695, 4294901760
    %1063 = vmatpush1.msra.mxu0 %v1062
    %1064 = vmatprep.subr.mxu0 0.0
    %v1065 = vand.u32 %v696, 4294901760
    %1066 = vmatpush1.msra.mxu0 %v1065
    %1067 = vmatprep.subr.mxu0 0.0
    %v1068 = vand.u32 %v697, 4294901760
    %1069 = vmatpush1.msra.mxu0 %v1068
    %1070 = vmatprep.subr.mxu0 0.0
    %1071 = vmatpush1.msra.mxu0 0.0
    %1072 = vmatprep.subr.mxu0 0.0
    %1073 = vmatpush1.msra.mxu0 0.0
    %1074 = vmatprep.subr.mxu0 0.0
    %1075 = vmatpush1.msra.mxu0 0.0
    %1076 = vmatprep.subr.mxu0 0.0
    %1077 = vmatpush1.msra.mxu0 0.0
    %1078 = vmatprep.subr.mxu0 0.0
    %1079 = vmatpush1.msra.mxu0 0.0
    %1080 = vmatprep.subr.mxu0 0.0
    %1081 = vmatpush1.msra.mxu0 0.0
    %1082 = vmatprep.subr.mxu0 0.0
    %1083 = vmatpush1.msra.mxu0 0.0
    %1084 = vmatprep.subr.mxu0 0.0
    %1085 = vmatpush1.msra.mxu0 0.0
    %1086 = vmatprep.subr.mxu0 0.0
    %1087 = vmatpush1.msra.mxu0 0.0
    %1088 = vmatprep.subr.mxu0 0.0
    %1089 = vmatpush1.msra.mxu0 0.0
    %1090 = vmatprep.subr.mxu0 0.0
    %1091 = vmatpush1.msra.mxu0 0.0
    %1092 = vmatprep.subr.mxu0 0.0
    %1093 = vmatpush1.msra.mxu0 0.0
    %1094 = vmatprep.subr.mxu0 0.0
    %1095 = vmatpush1.msra.mxu0 0.0
    %1096 = vmatprep.subr.mxu0 0.0
    %1097 = vmatpush1.msra.mxu0 0.0
    %1098 = vmatprep.subr.mxu0 0.0
    %1099 = vmatpush1.msra.mxu0 0.0
    %1100 = vmatprep.subr.mxu0 0.0
    %1101 = vmatpush1.msra.mxu0 0.0
    %1102 = vmatprep.subr.mxu0 0.0
    %1103 = vmatpush1.msra.mxu0 0.0
    %1104 = vmatprep.subr.mxu0 0.0
    %1105 = vmatpush1.msra.mxu0 0.0
    %1106 = vmatprep.subr.mxu0 0.0
    %1107 = vmatpush1.msra.mxu0 0.0
    %1108 = vmatprep.subr.mxu0 0.0
    %1109 = vmatpush1.msra.mxu0 0.0
    %1110 = vmatprep.subr.mxu0 0.0
    %1111 = vmatpush1.msra.mxu0 0.0
    %1112 = vmatprep.subr.mxu0 0.0
    %1113 = vmatpush1.msra.mxu0 0.0
    %1114 = vmatprep.subr.mxu0 0.0
    %1115 = vmatpush1.msra.mxu0 0.0
    %1116 = vmatprep.subr.mxu0 0.0
    %1117 = vmatpush1.msra.mxu0 0.0
    %1118 = vmatprep.subr.mxu0 0.0
    %1119 = vmatpush1.msra.mxu0 0.0
    %1120 = vmatprep.subr.mxu0 0.0
    %1121 = vmatpush1.msra.mxu0 0.0
    %1122 = vmatprep.subr.mxu0 0.0
    %1123 = vmatpush1.msra.mxu0 0.0
    %1124 = vmatprep.subr.mxu0 0.0
    %1125 = vmatpush1.msra.mxu0 0.0
    %1126 = vmatprep.mubr.f32.mxu0 0.0
    %v1127 = vand.u32 %v728, 4294901760
    %v1128 = vsub.f32 %v728, %v1127
    %v1129 = vand.u32 %v1128, 4294901760
    %1130 = vmatmul.mubr.f32.gmra.mrb[0].mxu0 %v1129
    %v1131 = vpop.f32.mrb[0].mxu0
    %v1132 = vadd.f32 %v1034, %v1131
    %v1133 = vpop.f32.mrb[0].mxu0
    %1134 = vmatprep.mubr.f32.mxu0 0.0
    %v1135 = vand.u32 %v731, 4294901760
    %v1136 = vsub.f32 %v731, %v1135
    %v1137 = vand.u32 %v1136, 4294901760
    %1138 = vmatmul.mubr.f32.gmra.mrb[0].mxu0 %v1137
    %v1139 = vpop.f32.mrb[0].mxu0
    %v1140 = vadd.f32 %v1041, %v1139
    %v1141 = vpop.f32.mrb[0].mxu0
    %1142 = vmatprep.mubr.f32.mxu0 0.0
    %v1143 = vand.u32 %v734, 4294901760
    %v1144 = vsub.f32 %v734, %v1143
    %v1145 = vand.u32 %v1144, 4294901760
    %1146 = vmatmul.mubr.f32.gmra.mrb[0].mxu0 %v1145
    %v1147 = vpop.f32.mrb[0].mxu0
    %v1148 = vadd.f32 %v1048, %v1147
    %v1149 = vpop.f32.mrb[0].mxu0
    %1150 = vmatprep.mubr.f32.mxu0 0.0
    %v1151 = vand.u32 %v737, 4294901760
    %v1152 = vsub.f32 %v737, %v1151
    %v1153 = vand.u32 %v1152, 4294901760
    %1154 = vmatmul.mubr.f32.gmra.mrb[0].mxu0 %v1153
    %v1155 = vpop.f32.mrb[0].mxu0
    %v1156 = vadd.f32 %v1055, %v1155
    %v1157 = vpop.f32.mrb[0].mxu0
    %1158 = vdwg.mxu0
    %1159 = vmatprep.subr.mxu0 0.0
    %v1160 = vand.u32 %v694, 4294901760
    %v1161 = vsub.f32 %v694, %v1160
    %v1162 = vand.u32 %v1161, 4294901760
    %1163 = vmatpush1.msra.mxu0 %v1162
    %1164 = vmatprep.subr.mxu0 0.0
    %v1165 = vand.u32 %v695, 4294901760
    %v1166 = vsub.f32 %v695, %v1165
    %v1167 = vand.u32 %v1166, 4294901760
    %1168 = vmatpush1.msra.mxu0 %v1167
    %1169 = vmatprep.subr.mxu0 0.0
    %v1170 = vand.u32 %v696, 4294901760
    %v1171 = vsub.f32 %v696, %v1170
    %v1172 = vand.u32 %v1171, 4294901760
    %1173 = vmatpush1.msra.mxu0 %v1172
    %1174 = vmatprep.subr.mxu0 0.0
    %v1175 = vand.u32 %v697, 4294901760
    %v1176 = vsub.f32 %v697, %v1175
    %v1177 = vand.u32 %v1176, 4294901760
    %1178 = vmatpush1.msra.mxu0 %v1177
    %1179 = vmatprep.subr.mxu0 0.0
    %1180 = vmatpush1.msra.mxu0 0.0
    %1181 = vmatprep.subr.mxu0 0.0
    %1182 = vmatpush1.msra.mxu0 0.0
    %1183 = vmatprep.subr.mxu0 0.0
    %1184 = vmatpush1.msra.mxu0 0.0
    %1185 = vmatprep.subr.mxu0 0.0
    %1186 = vmatpush1.msra.mxu0 0.0
    %1187 = vmatprep.subr.mxu0 0.0
    %1188 = vmatpush1.msra.mxu0 0.0
    %1189 = vmatprep.subr.mxu0 0.0
    %1190 = vmatpush1.msra.mxu0 0.0
    %1191 = vmatprep.subr.mxu0 0.0
    %1192 = vmatpush1.msra.mxu0 0.0
    %1193 = vmatprep.subr.mxu0 0.0
    %1194 = vmatpush1.msra.mxu0 0.0
    %1195 = vmatprep.subr.mxu0 0.0
    %1196 = vmatpush1.msra.mxu0 0.0
    %1197 = vmatprep.subr.mxu0 0.0
    %1198 = vmatpush1.msra.mxu0 0.0
    %1199 = vmatprep.subr.mxu0 0.0
    %1200 = vmatpush1.msra.mxu0 0.0
    %1201 = vmatprep.subr.mxu0 0.0
    %1202 = vmatpush1.msra.mxu0 0.0
    %1203 = vmatprep.subr.mxu0 0.0
    %1204 = vmatpush1.msra.mxu0 0.0
    %1205 = vmatprep.subr.mxu0 0.0
    %1206 = vmatpush1.msra.mxu0 0.0
    %1207 = vmatprep.subr.mxu0 0.0
    %1208 = vmatpush1.msra.mxu0 0.0
    %1209 = vmatprep.subr.mxu0 0.0
    %1210 = vmatpush1.msra.mxu0 0.0
    %1211 = vmatprep.subr.mxu0 0.0
    %1212 = vmatpush1.msra.mxu0 0.0
    %1213 = vmatprep.subr.mxu0 0.0
    %1214 = vmatpush1.msra.mxu0 0.0
    %1215 = vmatprep.subr.mxu0 0.0
    %1216 = vmatpush1.msra.mxu0 0.0
    %1217 = vmatprep.subr.mxu0 0.0
    %1218 = vmatpush1.msra.mxu0 0.0
    %1219 = vmatprep.subr.mxu0 0.0
    %1220 = vmatpush1.msra.mxu0 0.0
    %1221 = vmatprep.subr.mxu0 0.0
    %1222 = vmatpush1.msra.mxu0 0.0
    %1223 = vmatprep.subr.mxu0 0.0
    %1224 = vmatpush1.msra.mxu0 0.0
    %1225 = vmatprep.subr.mxu0 0.0
    %1226 = vmatpush1.msra.mxu0 0.0
    %1227 = vmatprep.subr.mxu0 0.0
    %1228 = vmatpush1.msra.mxu0 0.0
    %1229 = vmatprep.subr.mxu0 0.0
    %1230 = vmatpush1.msra.mxu0 0.0
    %1231 = vmatprep.subr.mxu0 0.0
    %1232 = vmatpush1.msra.mxu0 0.0
    %1233 = vmatprep.subr.mxu0 0.0
    %1234 = vmatpush1.msra.mxu0 0.0
    %1235 = vmatprep.mubr.f32.mxu0 0.0
    %v1236 = vand.u32 %v728, 4294901760
    %1237 = vmatmul.mubr.f32.gmra.mrb[0].mxu0 %v1236
    %v1238 = vpop.f32.mrb[0].mxu0
    %v1239 = vadd.f32 %v1132, %v1238
    %v1240 = vpop.f32.mrb[0].mxu0
    %1241 = vmatprep.mubr.f32.mxu0 0.0
    %v1242 = vand.u32 %v731, 4294901760
    %1243 = vmatmul.mubr.f32.gmra.mrb[0].mxu0 %v1242
    %v1244 = vpop.f32.mrb[0].mxu0
    %v1245 = vadd.f32 %v1140, %v1244
    %v1246 = vpop.f32.mrb[0].mxu0
    %1247 = vmatprep.mubr.f32.mxu0 0.0
    %v1248 = vand.u32 %v734, 4294901760
    %1249 = vmatmul.mubr.f32.gmra.mrb[0].mxu0 %v1248
    %v1250 = vpop.f32.mrb[0].mxu0
    %v1251 = vadd.f32 %v1148, %v1250
    %v1252 = vpop.f32.mrb[0].mxu0
    %1253 = vmatprep.mubr.f32.mxu0 0.0
    %v1254 = vand.u32 %v737, 4294901760
    %1255 = vmatmul.mubr.f32.gmra.mrb[0].mxu0 %v1254
    %v1256 = vpop.f32.mrb[0].mxu0
    %v1257 = vadd.f32 %v1156, %v1256
    %v1258 = vpop.f32.mrb[0].mxu0
    %1259 = vdwg.mxu0
    %1260 = vmatprep.subr.mxu0 0.0
    %v1261 = vand.u32 %v694, 4294901760
    %1262 = vmatpush1.msra.mxu0 %v1261
    %1263 = vmatprep.subr.mxu0 0.0
    %v1264 = vand.u32 %v695, 4294901760
    %1265 = vmatpush1.msra.mxu0 %v1264
    %1266 = vmatprep.subr.mxu0 0.0
    %v1267 = vand.u32 %v696, 4294901760
    %1268 = vmatpush1.msra.mxu0 %v1267
    %1269 = vmatprep.subr.mxu0 0.0
    %v1270 = vand.u32 %v697, 4294901760
    %1271 = vmatpush1.msra.mxu0 %v1270
    %1272 = vmatprep.subr.mxu0 0.0
    %1273 = vmatpush1.msra.mxu0 0.0
    %1274 = vmatprep.subr.mxu0 0.0
    %1275 = vmatpush1.msra.mxu0 0.0
    %1276 = vmatprep.subr.mxu0 0.0
    %1277 = vmatpush1.msra.mxu0 0.0
    %1278 = vmatprep.subr.mxu0 0.0
    %1279 = vmatpush1.msra.mxu0 0.0
    %1280 = vmatprep.subr.mxu0 0.0
    %1281 = vmatpush1.msra.mxu0 0.0
    %1282 = vmatprep.subr.mxu0 0.0
    %1283 = vmatpush1.msra.mxu0 0.0
    %1284 = vmatprep.subr.mxu0 0.0
    %1285 = vmatpush1.msra.mxu0 0.0
    %1286 = vmatprep.subr.mxu0 0.0
    %1287 = vmatpush1.msra.mxu0 0.0
    %1288 = vmatprep.subr.mxu0 0.0
    %1289 = vmatpush1.msra.mxu0 0.0
    %1290 = vmatprep.subr.mxu0 0.0
    %1291 = vmatpush1.msra.mxu0 0.0
    %1292 = vmatprep.subr.mxu0 0.0
    %1293 = vmatpush1.msra.mxu0 0.0
    %1294 = vmatprep.subr.mxu0 0.0
    %1295 = vmatpush1.msra.mxu0 0.0
    %1296 = vmatprep.subr.mxu0 0.0
    %1297 = vmatpush1.msra.mxu0 0.0
    %1298 = vmatprep.subr.mxu0 0.0
    %1299 = vmatpush1.msra.mxu0 0.0
    %1300 = vmatprep.subr.mxu0 0.0
    %1301 = vmatpush1.msra.mxu0 0.0
    %1302 = vmatprep.subr.mxu0 0.0
    %1303 = vmatpush1.msra.mxu0 0.0
    %1304 = vmatprep.subr.mxu0 0.0
    %1305 = vmatpush1.msra.mxu0 0.0
    %1306 = vmatprep.subr.mxu0 0.0
    %1307 = vmatpush1.msra.mxu0 0.0
    %1308 = vmatprep.subr.mxu0 0.0
    %1309 = vmatpush1.msra.mxu0 0.0
    %1310 = vmatprep.subr.mxu0 0.0
    %1311 = vmatpush1.msra.mxu0 0.0
    %1312 = vmatprep.subr.mxu0 0.0
    %1313 = vmatpush1.msra.mxu0 0.0
    %1314 = vmatprep.subr.mxu0 0.0
    %1315 = vmatpush1.msra.mxu0 0.0
    %1316 = vmatprep.subr.mxu0 0.0
    %1317 = vmatpush1.msra.mxu0 0.0
    %1318 = vmatprep.subr.mxu0 0.0
    %1319 = vmatpush1.msra.mxu0 0.0
    %1320 = vmatprep.subr.mxu0 0.0
    %1321 = vmatpush1.msra.mxu0 0.0
    %1322 = vmatprep.subr.mxu0 0.0
    %1323 = vmatpush1.msra.mxu0 0.0
    %1324 = vmatprep.subr.mxu0 0.0
    %1325 = vmatpush1.msra.mxu0 0.0
    %1326 = vmatprep.subr.mxu0 0.0
    %1327 = vmatpush1.msra.mxu0 0.0
    %1328 = vmatprep.mubr.f32.mxu0 0.0
    %v1329 = vand.u32 %v728, 4294901760
    %1330 = vmatmul.mubr.f32.gmra.mrb[0].mxu0 %v1329
    %v1331 = vpop.f32.mrb[0].mxu0
    %v1332 = vadd.f32 %v1239, %v1331
    %v1333 = vpop.f32.mrb[0].mxu0
    %1334 = vmatprep.mubr.f32.mxu0 0.0
    %v1335 = vand.u32 %v731, 4294901760
    %1336 = vmatmul.mubr.f32.gmra.mrb[0].mxu0 %v1335
    %v1337 = vpop.f32.mrb[0].mxu0
    %v1338 = vadd.f32 %v1245, %v1337
    %v1339 = vpop.f32.mrb[0].mxu0
    %1340 = vmatprep.mubr.f32.mxu0 0.0
    %v1341 = vand.u32 %v734, 4294901760
    %1342 = vmatmul.mubr.f32.gmra.mrb[0].mxu0 %v1341
    %v1343 = vpop.f32.mrb[0].mxu0
    %v1344 = vadd.f32 %v1251, %v1343
    %v1345 = vpop.f32.mrb[0].mxu0
    %1346 = vmatprep.mubr.f32.mxu0 0.0
    %v1347 = vand.u32 %v737, 4294901760
    %1348 = vmatmul.mubr.f32.gmra.mrb[0].mxu0 %v1347
    %v1349 = vpop.f32.mrb[0].mxu0
    %v1350 = vadd.f32 %v1257, %v1349
    %v1351 = vpop.f32.mrb[0].mxu0
    %1352 = vdwg.mxu0
    %v1353 = vmul.f32 %v1332, 0.2
    %v1354 = vmul.f32 %v1338, 0.2
    %v1355 = vmul.f32 %v1344, 0.2
    %v1356 = vmul.f32 %v1350, 0.2
    %v1357 = vmax.f32 %v1332, %v1353
    %v1358 = vmax.f32 %v1338, %v1354
    %v1359 = vmax.f32 %v1344, %v1355
    %v1360 = vmax.f32 %v1350, %v1356
    %v1361 = vld [vmem:[%s6] sm:$0x1]
    %s1362 = sld [smem:[#allocation2]]
    %v1363 = vstv %s1362
    %v1365 = vsel %vm726, %v1361, 0
    %1367 = vmatprep.subr.mxu0 0.0
    %v1368 = vand.u32 %v1357, 4294901760
    %1369 = vmatpush1.msra.mxu0 %v1368
    %1370 = vmatprep.subr.mxu0 0.0
    %v1371 = vand.u32 %v1358, 4294901760
    %1372 = vmatpush1.msra.mxu0 %v1371
    %1373 = vmatprep.subr.mxu0 0.0
    %v1374 = vand.u32 %v1359, 4294901760
    %1375 = vmatpush1.msra.mxu0 %v1374
    %1376 = vmatprep.subr.mxu0 0.0
    %v1377 = vand.u32 %v1360, 4294901760
    %1378 = vmatpush1.msra.mxu0 %v1377
    %1379 = vmatprep.subr.mxu0 0.0
    %1380 = vmatpush1.msra.mxu0 0.0
    %1381 = vmatprep.subr.mxu0 0.0
    %1382 = vmatpush1.msra.mxu0 0.0
    %1383 = vmatprep.subr.mxu0 0.0
    %1384 = vmatpush1.msra.mxu0 0.0
    %1385 = vmatprep.subr.mxu0 0.0
    %1386 = vmatpush1.msra.mxu0 0.0
    %1387 = vmatprep.subr.mxu0 0.0
    %1388 = vmatpush1.msra.mxu0 0.0
    %1389 = vmatprep.subr.mxu0 0.0
    %1390 = vmatpush1.msra.mxu0 0.0
    %1391 = vmatprep.subr.mxu0 0.0
    %1392 = vmatpush1.msra.mxu0 0.0
    %1393 = vmatprep.subr.mxu0 0.0
    %1394 = vmatpush1.msra.mxu0 0.0
    %1395 = vmatprep.subr.mxu0 0.0
    %1396 = vmatpush1.msra.mxu0 0.0
    %1397 = vmatprep.subr.mxu0 0.0
    %1398 = vmatpush1.msra.mxu0 0.0
    %1399 = vmatprep.subr.mxu0 0.0
    %1400 = vmatpush1.msra.mxu0 0.0
    %1401 = vmatprep.subr.mxu0 0.0
    %1402 = vmatpush1.msra.mxu0 0.0
    %1403 = vmatprep.subr.mxu0 0.0
    %1404 = vmatpush1.msra.mxu0 0.0
    %1405 = vmatprep.subr.mxu0 0.0
    %1406 = vmatpush1.msra.mxu0 0.0
    %1407 = vmatprep.subr.mxu0 0.0
    %1408 = vmatpush1.msra.mxu0 0.0
    %1409 = vmatprep.subr.mxu0 0.0
    %1410 = vmatpush1.msra.mxu0 0.0
    %1411 = vmatprep.subr.mxu0 0.0
    %1412 = vmatpush1.msra.mxu0 0.0
    %1413 = vmatprep.subr.mxu0 0.0
    %1414 = vmatpush1.msra.mxu0 0.0
    %1415 = vmatprep.subr.mxu0 0.0
    %1416 = vmatpush1.msra.mxu0 0.0
    %1417 = vmatprep.subr.mxu0 0.0
    %1418 = vmatpush1.msra.mxu0 0.0
    %1419 = vmatprep.subr.mxu0 0.0
    %1420 = vmatpush1.msra.mxu0 0.0
    %1421 = vmatprep.subr.mxu0 0.0
    %1422 = vmatpush1.msra.mxu0 0.0
    %1423 = vmatprep.subr.mxu0 0.0
    %1424 = vmatpush1.msra.mxu0 0.0
    %1425 = vmatprep.subr.mxu0 0.0
    %1426 = vmatpush1.msra.mxu0 0.0
    %1427 = vmatprep.subr.mxu0 0.0
    %1428 = vmatpush1.msra.mxu0 0.0
    %1429 = vmatprep.subr.mxu0 0.0
    %1430 = vmatpush1.msra.mxu0 0.0
    %1431 = vmatprep.subr.mxu0 0.0
    %1432 = vmatpush1.msra.mxu0 0.0
    %1433 = vmatprep.subr.mxu0 0.0
    %1434 = vmatpush1.msra.mxu0 0.0
    %1435 = vmatprep.mubr.f32.mxu0 0.0
    %v1436 = vand.u32 %v1365, 4294901760
    %v1437 = vsub.f32 %v1365, %v1436
    %v1438 = vand.u32 %v1437, 4294901760
    %v1439 = vsub.f32 %v1437, %v1438
    %v1440 = vand.u32 %v1439, 4294901760
    %1441 = vmatmul.mubr.f32.gmra.mrb[0].mxu0 %v1440
    %v1442 = vpop.f32.mrb[0].mxu0
    %v1443 = vadd.f32 %v1363, %v1442
    %v1444 = vpop.f32.mrb[0].mxu0
    %1445 = vdwg.mxu0
    %1446 = vmatprep.subr.mxu0 0.0
    %v1447 = vand.u32 %v1357, 4294901760
    %v1448 = vsub.f32 %v1357, %v1447
    %v1449 = vand.u32 %v1448, 4294901760
    %v1450 = vsub.f32 %v1448, %v1449
    %v1451 = vand.u32 %v1450, 4294901760
    %1452 = vmatpush1.msra.mxu0 %v1451
    %1453 = vmatprep.subr.mxu0 0.0
    %v1454 = vand.u32 %v1358, 4294901760
    %v1455 = vsub.f32 %v1358, %v1454
    %v1456 = vand.u32 %v1455, 4294901760
    %v1457 = vsub.f32 %v1455, %v1456
    %v1458 = vand.u32 %v1457, 4294901760
    %1459 = vmatpush1.msra.mxu0 %v1458
    %1460 = vmatprep.subr.mxu0 0.0
    %v1461 = vand.u32 %v1359, 4294901760
    %v1462 = vsub.f32 %v1359, %v1461
    %v1463 = vand.u32 %v1462, 4294901760
    %v1464 = vsub.f32 %v1462, %v1463
    %v1465 = vand.u32 %v1464, 4294901760
    %1466 = vmatpush1.msra.mxu0 %v1465
    %1467 = vmatprep.subr.mxu0 0.0
    %v1468 = vand.u32 %v1360, 4294901760
    %v1469 = vsub.f32 %v1360, %v1468
    %v1470 = vand.u32 %v1469, 4294901760
    %v1471 = vsub.f32 %v1469, %v1470
    %v1472 = vand.u32 %v1471, 4294901760
    %1473 = vmatpush1.msra.mxu0 %v1472
    %1474 = vmatprep.subr.mxu0 0.0
    %1475 = vmatpush1.msra.mxu0 0.0
    %1476 = vmatprep.subr.mxu0 0.0
    %1477 = vmatpush1.msra.mxu0 0.0
    %1478 = vmatprep.subr.mxu0 0.0
    %1479 = vmatpush1.msra.mxu0 0.0
    %1480 = vmatprep.subr.mxu0 0.0
    %1481 = vmatpush1.msra.mxu0 0.0
    %1482 = vmatprep.subr.mxu0 0.0
    %1483 = vmatpush1.msra.mxu0 0.0
    %1484 = vmatprep.subr.mxu0 0.0
    %1485 = vmatpush1.msra.mxu0 0.0
    %1486 = vmatprep.subr.mxu0 0.0
    %1487 = vmatpush1.msra.mxu0 0.0
    %1488 = vmatprep.subr.mxu0 0.0
    %1489 = vmatpush1.msra.mxu0 0.0
    %1490 = vmatprep.subr.mxu0 0.0
    %1491 = vmatpush1.msra.mxu0 0.0
    %1492 = vmatprep.subr.mxu0 0.0
    %1493 = vmatpush1.msra.mxu0 0.0
    %1494 = vmatprep.subr.mxu0 0.0
    %1495 = vmatpush1.msra.mxu0 0.0
    %1496 = vmatprep.subr.mxu0 0.0
    %1497 = vmatpush1.msra.mxu0 0.0
    %1498 = vmatprep.subr.mxu0 0.0
    %1499 = vmatpush1.msra.mxu0 0.0
    %1500 = vmatprep.subr.mxu0 0.0
    %1501 = vmatpush1.msra.mxu0 0.0
    %1502 = vmatprep.subr.mxu0 0.0
    %1503 = vmatpush1.msra.mxu0 0.0
    %1504 = vmatprep.subr.mxu0 0.0
    %1505 = vmatpush1.msra.mxu0 0.0
    %1506 = vmatprep.subr.mxu0 0.0
    %1507 = vmatpush1.msra.mxu0 0.0
    %1508 = vmatprep.subr.mxu0 0.0
    %1509 = vmatpush1.msra.mxu0 0.0
    %1510 = vmatprep.subr.mxu0 0.0
    %1511 = vmatpush1.msra.mxu0 0.0
    %1512 = vmatprep.subr.mxu0 0.0
    %1513 = vmatpush1.msra.mxu0 0.0
    %1514 = vmatprep.subr.mxu0 0.0
    %1515 = vmatpush1.msra.mxu0 0.0
    %1516 = vmatprep.subr.mxu0 0.0
    %1517 = vmatpush1.msra.mxu0 0.0
    %1518 = vmatprep.subr.mxu0 0.0
    %1519 = vmatpush1.msra.mxu0 0.0
    %1520 = vmatprep.subr.mxu0 0.0
    %1521 = vmatpush1.msra.mxu0 0.0
    %1522 = vmatprep.subr.mxu0 0.0
    %1523 = vmatpush1.msra.mxu0 0.0
    %1524 = vmatprep.subr.mxu0 0.0
    %1525 = vmatpush1.msra.mxu0 0.0
    %1526 = vmatprep.subr.mxu0 0.0
    %1527 = vmatpush1.msra.mxu0 0.0
    %1528 = vmatprep.subr.mxu0 0.0
    %1529 = vmatpush1.msra.mxu0 0.0
    %1530 = vmatprep.mubr.f32.mxu0 0.0
    %v1531 = vand.u32 %v1365, 4294901760
    %1532 = vmatmul.mubr.f32.gmra.mrb[0].mxu0 %v1531
    %v1533 = vpop.f32.mrb[0].mxu0
    %v1534 = vadd.f32 %v1443, %v1533
    %v1535 = vpop.f32.mrb[0].mxu0
    %1536 = vdwg.mxu0
    %1537 = vmatprep.subr.mxu0 0.0
    %v1538 = vand.u32 %v1357, 4294901760
    %v1539 = vsub.f32 %v1357, %v1538
    %1540 = vmatpush1.msra.mxu0 %v1539
    %1541 = vmatprep.subr.mxu0 0.0
    %v1542 = vand.u32 %v1358, 4294901760
    %v1543 = vsub.f32 %v1358, %v1542
    %1544 = vmatpush1.msra.mxu0 %v1543
    %1545 = vmatprep.subr.mxu0 0.0
    %v1546 = vand.u32 %v1359, 4294901760
    %v1547 = vsub.f32 %v1359, %v1546
    %1548 = vmatpush1.msra.mxu0 %v1547
    %1549 = vmatprep.subr.mxu0 0.0
    %v1550 = vand.u32 %v1360, 4294901760
    %v1551 = vsub.f32 %v1360, %v1550
    %1552 = vmatpush1.msra.mxu0 %v1551
    %1553 = vmatprep.subr.mxu0 0.0
    %1554 = vmatpush1.msra.mxu0 0.0
    %1555 = vmatprep.subr.mxu0 0.0
    %1556 = vmatpush1.msra.mxu0 0.0
    %1557 = vmatprep.subr.mxu0 0.0
    %1558 = vmatpush1.msra.mxu0 0.0
    %1559 = vmatprep.subr.mxu0 0.0
    %1560 = vmatpush1.msra.mxu0 0.0
    %1561 = vmatprep.subr.mxu0 0.0
    %1562 = vmatpush1.msra.mxu0 0.0
    %1563 = vmatprep.subr.mxu0 0.0
    %1564 = vmatpush1.msra.mxu0 0.0
    %1565 = vmatprep.subr.mxu0 0.0
    %1566 = vmatpush1.msra.mxu0 0.0
    %1567 = vmatprep.subr.mxu0 0.0
    %1568 = vmatpush1.msra.mxu0 0.0
    %1569 = vmatprep.subr.mxu0 0.0
    %1570 = vmatpush1.msra.mxu0 0.0
    %1571 = vmatprep.subr.mxu0 0.0
    %1572 = vmatpush1.msra.mxu0 0.0
    %1573 = vmatprep.subr.mxu0 0.0
    %1574 = vmatpush1.msra.mxu0 0.0
    %1575 = vmatprep.subr.mxu0 0.0
    %1576 = vmatpush1.msra.mxu0 0.0
    %1577 = vmatprep.subr.mxu0 0.0
    %1578 = vmatpush1.msra.mxu0 0.0
    %1579 = vmatprep.subr.mxu0 0.0
    %1580 = vmatpush1.msra.mxu0 0.0
    %1581 = vmatprep.subr.mxu0 0.0
    %1582 = vmatpush1.msra.mxu0 0.0
    %1583 = vmatprep.subr.mxu0 0.0
    %1584 = vmatpush1.msra.mxu0 0.0
    %1585 = vmatprep.subr.mxu0 0.0
    %1586 = vmatpush1.msra.mxu0 0.0
    %1587 = vmatprep.subr.mxu0 0.0
    %1588 = vmatpush1.msra.mxu0 0.0
    %1589 = vmatprep.subr.mxu0 0.0
    %1590 = vmatpush1.msra.mxu0 0.0
    %1591 = vmatprep.subr.mxu0 0.0
    %1592 = vmatpush1.msra.mxu0 0.0
    %1593 = vmatprep.subr.mxu0 0.0
    %1594 = vmatpush1.msra.mxu0 0.0
    %1595 = vmatprep.subr.mxu0 0.0
    %1596 = vmatpush1.msra.mxu0 0.0
    %1597 = vmatprep.subr.mxu0 0.0
    %1598 = vmatpush1.msra.mxu0 0.0
    %1599 = vmatprep.subr.mxu0 0.0
    %1600 = vmatpush1.msra.mxu0 0.0
    %1601 = vmatprep.subr.mxu0 0.0
    %1602 = vmatpush1.msra.mxu0 0.0
    %1603 = vmatprep.subr.mxu0 0.0
    %1604 = vmatpush1.msra.mxu0 0.0
    %1605 = vmatprep.subr.mxu0 0.0
    %1606 = vmatpush1.msra.mxu0 0.0
    %1607 = vmatprep.subr.mxu0 0.0
    %1608 = vmatpush1.msra.mxu0 0.0
    %1609 = vmatprep.mubr.f32.mxu0 0.0
    %v1610 = vand.u32 %v1365, 4294901760
    %v1611 = vsub.f32 %v1365, %v1610
    %1612 = vmatmul.mubr.f32.gmra.mrb[0].mxu0 %v1611
    %v1613 = vpop.f32.mrb[0].mxu0
    %v1614 = vadd.f32 %v1534, %v1613
    %v1615 = vpop.f32.mrb[0].mxu0
    %1616 = vdwg.mxu0
    %1617 = vmatprep.subr.mxu0 0.0
    %v1618 = vand.u32 %v1357, 4294901760
    %1619 = vmatpush1.msra.mxu0 %v1618
    %1620 = vmatprep.subr.mxu0 0.0
    %v1621 = vand.u32 %v1358, 4294901760
    %1622 = vmatpush1.msra.mxu0 %v1621
    %1623 = vmatprep.subr.mxu0 0.0
    %v1624 = vand.u32 %v1359, 4294901760
    %1625 = vmatpush1.msra.mxu0 %v1624
    %1626 = vmatprep.subr.mxu0 0.0
    %v1627 = vand.u32 %v1360, 4294901760
    %1628 = vmatpush1.msra.mxu0 %v1627
    %1629 = vmatprep.subr.mxu0 0.0
    %1630 = vmatpush1.msra.mxu0 0.0
    %1631 = vmatprep.subr.mxu0 0.0
    %1632 = vmatpush1.msra.mxu0 0.0
    %1633 = vmatprep.subr.mxu0 0.0
    %1634 = vmatpush1.msra.mxu0 0.0
    %1635 = vmatprep.subr.mxu0 0.0
    %1636 = vmatpush1.msra.mxu0 0.0
    %1637 = vmatprep.subr.mxu0 0.0
    %1638 = vmatpush1.msra.mxu0 0.0
    %1639 = vmatprep.subr.mxu0 0.0
    %1640 = vmatpush1.msra.mxu0 0.0
    %1641 = vmatprep.subr.mxu0 0.0
    %1642 = vmatpush1.msra.mxu0 0.0
    %1643 = vmatprep.subr.mxu0 0.0
    %1644 = vmatpush1.msra.mxu0 0.0
    %1645 = vmatprep.subr.mxu0 0.0
    %1646 = vmatpush1.msra.mxu0 0.0
    %1647 = vmatprep.subr.mxu0 0.0
    %1648 = vmatpush1.msra.mxu0 0.0
    %1649 = vmatprep.subr.mxu0 0.0
    %1650 = vmatpush1.msra.mxu0 0.0
    %1651 = vmatprep.subr.mxu0 0.0
    %1652 = vmatpush1.msra.mxu0 0.0
    %1653 = vmatprep.subr.mxu0 0.0
    %1654 = vmatpush1.msra.mxu0 0.0
    %1655 = vmatprep.subr.mxu0 0.0
    %1656 = vmatpush1.msra.mxu0 0.0
    %1657 = vmatprep.subr.mxu0 0.0
    %1658 = vmatpush1.msra.mxu0 0.0
    %1659 = vmatprep.subr.mxu0 0.0
    %1660 = vmatpush1.msra.mxu0 0.0
    %1661 = vmatprep.subr.mxu0 0.0
    %1662 = vmatpush1.msra.mxu0 0.0
    %1663 = vmatprep.subr.mxu0 0.0
    %1664 = vmatpush1.msra.mxu0 0.0
    %1665 = vmatprep.subr.mxu0 0.0
    %1666 = vmatpush1.msra.mxu0 0.0
    %1667 = vmatprep.subr.mxu0 0.0
    %1668 = vmatpush1.msra.mxu0 0.0
    %1669 = vmatprep.subr.mxu0 0.0
    %1670 = vmatpush1.msra.mxu0 0.0
    %1671 = vmatprep.subr.mxu0 0.0
    %1672 = vmatpush1.msra.mxu0 0.0
    %1673 = vmatprep.subr.mxu0 0.0
    %1674 = vmatpush1.msra.mxu0 0.0
    %1675 = vmatprep.subr.mxu0 0.0
    %1676 = vmatpush1.msra.mxu0 0.0
    %1677 = vmatprep.subr.mxu0 0.0
    %1678 = vmatpush1.msra.mxu0 0.0
    %1679 = vmatprep.subr.mxu0 0.0
    %1680 = vmatpush1.msra.mxu0 0.0
    %1681 = vmatprep.subr.mxu0 0.0
    %1682 = vmatpush1.msra.mxu0 0.0
    %1683 = vmatprep.subr.mxu0 0.0
    %1684 = vmatpush1.msra.mxu0 0.0
    %1685 = vmatprep.mubr.f32.mxu0 0.0
    %v1686 = vand.u32 %v1365, 4294901760
    %v1687 = vsub.f32 %v1365, %v1686
    %v1688 = vand.u32 %v1687, 4294901760
    %1689 = vmatmul.mubr.f32.gmra.mrb[0].mxu0 %v1688
    %v1690 = vpop.f32.mrb[0].mxu0
    %v1691 = vadd.f32 %v1614, %v1690
    %v1692 = vpop.f32.mrb[0].mxu0
    %1693 = vdwg.mxu0
    %1694 = vmatprep.subr.mxu0 0.0
    %v1695 = vand.u32 %v1357, 4294901760
    %v1696 = vsub.f32 %v1357, %v1695
    %v1697 = vand.u32 %v1696, 4294901760
    %1698 = vmatpush1.msra.mxu0 %v1697
    %1699 = vmatprep.subr.mxu0 0.0
    %v1700 = vand.u32 %v1358, 4294901760
    %v1701 = vsub.f32 %v1358, %v1700
    %v1702 = vand.u32 %v1701, 4294901760
    %1703 = vmatpush1.msra.mxu0 %v1702
    %1704 = vmatprep.subr.mxu0 0.0
    %v1705 = vand.u32 %v1359, 4294901760
    %v1706 = vsub.f32 %v1359, %v1705
    %v1707 = vand.u32 %v1706, 4294901760
    %1708 = vmatpush1.msra.mxu0 %v1707
    %1709 = vmatprep.subr.mxu0 0.0
    %v1710 = vand.u32 %v1360, 4294901760
    %v1711 = vsub.f32 %v1360, %v1710
    %v1712 = vand.u32 %v1711, 4294901760
    %1713 = vmatpush1.msra.mxu0 %v1712
    %1714 = vmatprep.subr.mxu0 0.0
    %1715 = vmatpush1.msra.mxu0 0.0
    %1716 = vmatprep.subr.mxu0 0.0
    %1717 = vmatpush1.msra.mxu0 0.0
    %1718 = vmatprep.subr.mxu0 0.0
    %1719 = vmatpush1.msra.mxu0 0.0
    %1720 = vmatprep.subr.mxu0 0.0
    %1721 = vmatpush1.msra.mxu0 0.0
    %1722 = vmatprep.subr.mxu0 0.0
    %1723 = vmatpush1.msra.mxu0 0.0
    %1724 = vmatprep.subr.mxu0 0.0
    %1725 = vmatpush1.msra.mxu0 0.0
    %1726 = vmatprep.subr.mxu0 0.0
    %1727 = vmatpush1.msra.mxu0 0.0
    %1728 = vmatprep.subr.mxu0 0.0
    %1729 = vmatpush1.msra.mxu0 0.0
    %1730 = vmatprep.subr.mxu0 0.0
    %1731 = vmatpush1.msra.mxu0 0.0
    %1732 = vmatprep.subr.mxu0 0.0
    %1733 = vmatpush1.msra.mxu0 0.0
    %1734 = vmatprep.subr.mxu0 0.0
    %1735 = vmatpush1.msra.mxu0 0.0
    %1736 = vmatprep.subr.mxu0 0.0
    %1737 = vmatpush1.msra.mxu0 0.0
    %1738 = vmatprep.subr.mxu0 0.0
    %1739 = vmatpush1.msra.mxu0 0.0
    %1740 = vmatprep.subr.mxu0 0.0
    %1741 = vmatpush1.msra.mxu0 0.0
    %1742 = vmatprep.subr.mxu0 0.0
    %1743 = vmatpush1.msra.mxu0 0.0
    %1744 = vmatprep.subr.mxu0 0.0
    %1745 = vmatpush1.msra.mxu0 0.0
    %1746 = vmatprep.subr.mxu0 0.0
    %1747 = vmatpush1.msra.mxu0 0.0
    %1748 = vmatprep.subr.mxu0 0.0
    %1749 = vmatpush1.msra.mxu0 0.0
    %1750 = vmatprep.subr.mxu0 0.0
    %1751 = vmatpush1.msra.mxu0 0.0
    %1752 = vmatprep.subr.mxu0 0.0
    %1753 = vmatpush1.msra.mxu0 0.0
    %1754 = vmatprep.subr.mxu0 0.0
    %1755 = vmatpush1.msra.mxu0 0.0
    %1756 = vmatprep.subr.mxu0 0.0
    %1757 = vmatpush1.msra.mxu0 0.0
    %1758 = vmatprep.subr.mxu0 0.0
    %1759 = vmatpush1.msra.mxu0 0.0
    %1760 = vmatprep.subr.mxu0 0.0
    %1761 = vmatpush1.msra.mxu0 0.0
    %1762 = vmatprep.subr.mxu0 0.0
    %1763 = vmatpush1.msra.mxu0 0.0
    %1764 = vmatprep.subr.mxu0 0.0
    %1765 = vmatpush1.msra.mxu0 0.0
    %1766 = vmatprep.subr.mxu0 0.0
    %1767 = vmatpush1.msra.mxu0 0.0
    %1768 = vmatprep.subr.mxu0 0.0
    %1769 = vmatpush1.msra.mxu0 0.0
    %1770 = vmatprep.mubr.f32.mxu0 0.0
    %v1771 = vand.u32 %v1365, 4294901760
    %1772 = vmatmul.mubr.f32.gmra.mrb[0].mxu0 %v1771
    %v1773 = vpop.f32.mrb[0].mxu0
    %v1774 = vadd.f32 %v1691, %v1773
    %v1775 = vpop.f32.mrb[0].mxu0
    %1776 = vdwg.mxu0
    %1777 = vmatprep.subr.mxu0 0.0
    %v1778 = vand.u32 %v1357, 4294901760
    %1779 = vmatpush1.msra.mxu0 %v1778
    %1780 = vmatprep.subr.mxu0 0.0
    %v1781 = vand.u32 %v1358, 4294901760
    %1782 = vmatpush1.msra.mxu0 %v1781
    %1783 = vmatprep.subr.mxu0 0.0
    %v1784 = vand.u32 %v1359, 4294901760
    %1785 = vmatpush1.msra.mxu0 %v1784
    %1786 = vmatprep.subr.mxu0 0.0
    %v1787 = vand.u32 %v1360, 4294901760
    %1788 = vmatpush1.msra.mxu0 %v1787
    %1789 = vmatprep.subr.mxu0 0.0
    %1790 = vmatpush1.msra.mxu0 0.0
    %1791 = vmatprep.subr.mxu0 0.0
    %1792 = vmatpush1.msra.mxu0 0.0
    %1793 = vmatprep.subr.mxu0 0.0
    %1794 = vmatpush1.msra.mxu0 0.0
    %1795 = vmatprep.subr.mxu0 0.0
    %1796 = vmatpush1.msra.mxu0 0.0
    %1797 = vmatprep.subr.mxu0 0.0
    %1798 = vmatpush1.msra.mxu0 0.0
    %1799 = vmatprep.subr.mxu0 0.0
    %1800 = vmatpush1.msra.mxu0 0.0
    %1801 = vmatprep.subr.mxu0 0.0
    %1802 = vmatpush1.msra.mxu0 0.0
    %1803 = vmatprep.subr.mxu0 0.0
    %1804 = vmatpush1.msra.mxu0 0.0
    %1805 = vmatprep.subr.mxu0 0.0
    %1806 = vmatpush1.msra.mxu0 0.0
    %1807 = vmatprep.subr.mxu0 0.0
    %1808 = vmatpush1.msra.mxu0 0.0
    %1809 = vmatprep.subr.mxu0 0.0
    %1810 = vmatpush1.msra.mxu0 0.0
    %1811 = vmatprep.subr.mxu0 0.0
    %1812 = vmatpush1.msra.mxu0 0.0
    %1813 = vmatprep.subr.mxu0 0.0
    %1814 = vmatpush1.msra.mxu0 0.0
    %1815 = vmatprep.subr.mxu0 0.0
    %1816 = vmatpush1.msra.mxu0 0.0
    %1817 = vmatprep.subr.mxu0 0.0
    %1818 = vmatpush1.msra.mxu0 0.0
    %1819 = vmatprep.subr.mxu0 0.0
    %1820 = vmatpush1.msra.mxu0 0.0
    %1821 = vmatprep.subr.mxu0 0.0
    %1822 = vmatpush1.msra.mxu0 0.0
    %1823 = vmatprep.subr.mxu0 0.0
    %1824 = vmatpush1.msra.mxu0 0.0
    %1825 = vmatprep.subr.mxu0 0.0
    %1826 = vmatpush1.msra.mxu0 0.0
    %1827 = vmatprep.subr.mxu0 0.0
    %1828 = vmatpush1.msra.mxu0 0.0
    %1829 = vmatprep.subr.mxu0 0.0
    %1830 = vmatpush1.msra.mxu0 0.0
    %1831 = vmatprep.subr.mxu0 0.0
    %1832 = vmatpush1.msra.mxu0 0.0
    %1833 = vmatprep.subr.mxu0 0.0
    %1834 = vmatpush1.msra.mxu0 0.0
    %1835 = vmatprep.subr.mxu0 0.0
    %1836 = vmatpush1.msra.mxu0 0.0
    %1837 = vmatprep.subr.mxu0 0.0
    %1838 = vmatpush1.msra.mxu0 0.0
    %1839 = vmatprep.subr.mxu0 0.0
    %1840 = vmatpush1.msra.mxu0 0.0
    %1841 = vmatprep.subr.mxu0 0.0
    %1842 = vmatpush1.msra.mxu0 0.0
    %1843 = vmatprep.subr.mxu0 0.0
    %1844 = vmatpush1.msra.mxu0 0.0
    %1845 = vmatprep.mubr.f32.mxu0 0.0
    %v1846 = vand.u32 %v1365, 4294901760
    %1847 = vmatmul.mubr.f32.gmra.mrb[0].mxu0 %v1846
    %v1848 = vpop.f32.mrb[0].mxu0
    %v1849 = vadd.f32 %v1774, %v1848
    %v1850 = vpop.f32.mrb[0].mxu0
    %1851 = vdwg.mxu0
    %1852 = vst [vmem:[#allocation3] sm:$0x1] %v1849
    // Predicated region
    $region34: #{tpu_custom_call.1} parent=1 // pred_check
      _
    $region35: #{tpu_custom_call.1} parent=1 // pred_check_branch
      %1854 = sbr.rel (0) target = $region37
    $region36: #{tpu_custom_call.1} parent=1 // pred_region
      %s1856 = ssub.s32 16, 16
      %1857 = vsyncadd [#allocation4], %s1856
      %s1859 = sshll.u32 [#allocation3], 4
      %s1860 = int_to_ptr.vmem [resolvable:$true] %s1859
      %1862 = dma.vmem_to_hbm [thread:$0]  %s1860, 16, %s8, [#allocation4]
    $region37: #{tpu_custom_call.1} parent=1 // pred_fallthru
      _
    // Predicated region
    $region38: #{tpu_custom_call.1} parent=1 // pred_check
      _
    $region39: #{tpu_custom_call.1} parent=1 // pred_check_branch
      %1864 = sbr.rel (0) target = $region41
    $region40: #{tpu_custom_call.1} parent=1 // pred_region
      %1865 = dma.done [#allocation4], 16
    $region41: #{tpu_custom_call.1} parent=1 // pred_fallthru
      _
    %1866 = vsyncpa [#allocation4], 1

</llo_original>
